<compile_context>
chip_gen: v7x
topology: tpu7x:2x2x1
jax: 0.10.0
libtpu: 0.0.40
codegen_flags: <defaults>
</compile_context>

<pallas_src>
import functools

import jax
import jax.numpy as jnp
from jax import lax
from jax.experimental import pallas as pl
from jax.experimental.pallas import tpu as pltpu


TOP = 16  # bf16 (16,128)-tile aligned row offset of the h1 interior in scratch


def residual_block_kernel(xp_ref, w1_ref, s1_ref, b1_ref, w2_ref, s2_ref,
                          b2_ref, out_ref, h1p_ref, *, height):
    # xp_ref : (Bt, H+2, W*Cin)       bf16  1-row-halo padded, lane-dense input
    # w1_ref : (3, W*Cin,  W*Cmid)    bf16  banded conv1 weights (one per dy)
    # s1/b1  : (1, W*Cmid)            f32   folded BN1 scale / bias (tiled over w)
    # w2_ref : (3, W*Cmid, W*Cout)    bf16  banded conv2 weights (one per dy)
    # s2/b2  : (1, W*Cout)            f32   folded BN2 scale / bias
    # out_ref: (Bt, H, W*Cout)        bf16  lane-dense output slab
    # h1p_ref: (Bt, TOP+H+1, W*Cmid)  bf16  scratch; h1 at rows [TOP, TOP+H)
    H = height
    Bt = xp_ref.shape[0]
    Lin = xp_ref.shape[-1]
    Lmid = w1_ref.shape[-1]
    Lout = w2_ref.shape[-1]
    M = Bt * H

    # ---- conv1: 3 accumulating MXU matmuls over row-shifted views -----------
    # LHS is a direct (lane-dense) view of the padded input; dx taps + column
    # padding live inside the banded weight matrices, so no im2col is built.
    x_c = xp_ref[:, 1:1 + H, :]                  # centre rows, reused by shortcut
    x_c2 = x_c.reshape(M, Lin)
    acc = jnp.dot(xp_ref[:, 0:H, :].reshape(M, Lin), w1_ref[0],
                  preferred_element_type=jnp.float32)
    acc += jnp.dot(x_c2, w1_ref[1], preferred_element_type=jnp.float32)
    acc += jnp.dot(xp_ref[:, 2:2 + H, :].reshape(M, Lin), w1_ref[2],
                   preferred_element_type=jnp.float32)

    # folded BN1 + ReLU in f32 (VPU), single down-cast for the next MXU pass
    h1 = jnp.maximum(acc * s1_ref[...] + b1_ref[...], 0.0).astype(jnp.bfloat16)

    # ---- h1 row-padded frame: aligned interior write + 2-row halo clear -----
    # Only the two halo rows are zeroed each step (never the whole scratch);
    # rows [0, TOP-1) are never read so they stay untouched.
    zrow = jnp.zeros((Bt, 1, Lmid), jnp.bfloat16)
    h1p_ref[:, TOP - 1:TOP, :] = zrow                         # top halo row
    h1p_ref[:, TOP + H:TOP + H + 1, :] = zrow                 # bottom halo row
    h1p_ref[:, TOP:TOP + H, :] = h1.reshape(Bt, H, Lmid)      # aligned interior

    # ---- conv2: 3 accumulating MXU matmuls (centre tap reuses the h1 value) -
    acc = jnp.dot(h1p_ref[:, TOP - 1:TOP - 1 + H, :].reshape(M, Lmid), w2_ref[0],
                  preferred_element_type=jnp.float32)
    acc += jnp.dot(h1, w2_ref[1], preferred_element_type=jnp.float32)
    acc += jnp.dot(h1p_ref[:, TOP + 1:TOP + 1 + H, :].reshape(M, Lmid), w2_ref[2],
                   preferred_element_type=jnp.float32)

    # ---- folded BN2 + identity shortcut + final ReLU, bf16 writeback --------
    h2 = acc * s2_ref[...] + b2_ref[...]
    out = jnp.maximum(h2 + x_c2.astype(jnp.float32), 0.0)
    out_ref[...] = out.reshape(Bt, H, Lout).astype(out_ref.dtype)


def _banded_conv_weights(w_hwio, width):
    """(3,3,Cin,Cout) HWIO -> (3, W*Cin, W*Cout) per-dy banded matrices.

    B_dy[wi*Cin + c, wo*Cout + k] = W[dy, wi - wo + 1, c, k] when the dx tap
    (wi - wo + 1) is in {0,1,2}, else 0 — i.e. the dx taps and the SAME
    column padding of the conv are folded into the weight matrix so the
    activation operand stays in its natural lane-dense (w, c) layout.
    """
    _, _, cin, cout = w_hwio.shape
    wi = jnp.arange(width)[:, None]
    wo = jnp.arange(width)[None, :]
    dx = wi - wo + 1                                       # (W, W)
    valid = (dx >= 0) & (dx <= 2)
    dx_c = jnp.clip(dx, 0, 2)
    mats = []
    for dy in range(3):
        taps = w_hwio[dy][dx_c]                            # (W, W, Cin, Cout)
        taps = jnp.where(valid[:, :, None, None], taps, 0.0)
        mats.append(jnp.transpose(taps, (0, 2, 1, 3))      # (W, Cin, W, Cout)
                    .reshape(width * cin, width * cout)
                    .astype(jnp.bfloat16))
    return jnp.stack(mats)


def residual_block(x_nchw, w1, gamma1, beta1, mean1, var1,
                   w2, gamma2, beta2, mean2, var2, eps=1e-5, batch_tile=None):
    """Wrapper: NCHW in / NCHW out (matches the PyTorch module, eval-mode BN)."""
    B, Cin, H, W = x_nchw.shape
    Cmid = w1.shape[-1]
    Cout = w2.shape[-1]
    assert Cin == Cout, "identity-shortcut configuration requires Cin == Cout"

    if batch_tile is None:
        # prefer an even grid length so the 'parallel' axis shards across both
        # v7x TensorCores; cap the tile so VMEM stays comfortable everywhere.
        batch_tile = next((bt for bt in (32, 16, 8, 4, 2, 1)
                           if B % bt == 0 and (B // bt) % 2 == 0),
                          next(bt for bt in (32, 16, 8, 4, 2, 1) if B % bt == 0))
    Bt = batch_tile
    assert B % Bt == 0

    # single fused input-prep pass: NCHW -> lane-dense (B, H, W*Cin) bf16 with a
    # 1-row top/bottom halo (column padding is folded into the banded weights).
    x = jnp.transpose(x_nchw, (0, 2, 3, 1)).astype(jnp.bfloat16)
    xp = jnp.pad(x.reshape(B, H, W * Cin), ((0, 0), (1, 1), (0, 0)))

    w1b = _banded_conv_weights(w1, W)                     # (3, W*Cin,  W*Cmid)
    w2b = _banded_conv_weights(w2, W)                     # (3, W*Cmid, W*Cout)

    # eval-mode BatchNorm folded into per-lane (w, c) scale / bias, kept in f32
    def fold_bn(gamma, beta, mean, var, C):
        inv = (gamma / jnp.sqrt(var + eps)).astype(jnp.float32)
        s = jnp.tile(inv, (W,)).reshape(1, W * C)
        b = jnp.tile((beta - mean * inv).astype(jnp.float32), (W,)).reshape(1, W * C)
        return s, b

    s1, b1 = fold_bn(gamma1, beta1, mean1, var1, Cmid)
    s2, b2 = fold_bn(gamma2, beta2, mean2, var2, Cout)

    kernel = functools.partial(residual_block_kernel, height=H)

    out_flat = pl.pallas_call(
        kernel,
        out_shape=jax.ShapeDtypeStruct((B, H, W * Cout), jnp.bfloat16),
        grid=(B // Bt,),
        in_specs=[
            pl.BlockSpec((Bt, H + 2, W * Cin),   lambda b: (b, 0, 0)),
            pl.BlockSpec((3, W * Cin, W * Cmid), lambda b: (0, 0, 0)),
            pl.BlockSpec((1, W * Cmid),          lambda b: (0, 0)),
            pl.BlockSpec((1, W * Cmid),          lambda b: (0, 0)),
            pl.BlockSpec((3, W * Cmid, W * Cout), lambda b: (0, 0, 0)),
            pl.BlockSpec((1, W * Cout),          lambda b: (0, 0)),
            pl.BlockSpec((1, W * Cout),          lambda b: (0, 0)),
        ],
        out_specs=pl.BlockSpec((Bt, H, W * Cout), lambda b: (b, 0, 0)),
        scratch_shapes=[pltpu.VMEM((Bt, TOP + H + 1, W * Cmid), jnp.bfloat16)],
        compiler_params=pltpu.CompilerParams(
            dimension_semantics=("parallel",)),
    )(xp, w1b, s1, b1, w2b, s2, b2)

    out = out_flat.reshape(B, H, W, Cout).astype(jnp.float32)
    return jnp.transpose(out, (0, 3, 1, 2))                       # -> NCHW


def _reference(x_nchw, w1, g1, be1, m1, v1, w2, g2, be2, m2, v2, eps=1e-5):
    """Pure-JAX f32 reference (lax conv) for correctness checking."""
    x = jnp.transpose(x_nchw, (0, 2, 3, 1)).astype(jnp.float32)
    dn = lax.conv_dimension_numbers(x.shape, w1.shape, ("NHWC", "HWIO", "NHWC"))

    def bn(y, g, b, m, v):
        return (y - m) / jnp.sqrt(v + eps) * g + b

    h = lax.conv_general_dilated(x, w1, (1, 1), "SAME", dimension_numbers=dn)
    h = jax.nn.relu(bn(h, g1, be1, m1, v1))
    h = lax.conv_general_dilated(h, w2, (1, 1), "SAME", dimension_numbers=dn)
    h = bn(h, g2, be2, m2, v2)
    out = jax.nn.relu(h + x)
    return jnp.transpose(out, (0, 3, 1, 2))


if __name__ == "__main__":
    # small shapes: batch=2, in_planes=planes=16, spatial 16x16, stride=1, 'B'
    B, C, H, W = 2, 16, 16, 16
    key = jax.random.PRNGKey(0)
    ks = jax.random.split(key, 11)

    def q(a):   # make test values bf16-representable so the f32 ref is a fair
        return a.astype(jnp.bfloat16).astype(jnp.float32)   # comparison target

    x = q(jax.random.normal(ks[0], (B, C, H, W), jnp.float32))         # NCHW
    w1 = q(jax.random.normal(ks[1], (3, 3, C, C), jnp.float32) * 0.1)  # HWIO
    w2 = q(jax.random.normal(ks[2], (3, 3, C, C), jnp.float32) * 0.1)  # HWIO
    gamma1 = jax.random.uniform(ks[3], (C,), jnp.float32, 0.5, 1.5)
    beta1  = jax.random.normal(ks[4], (C,), jnp.float32) * 0.1
    mean1  = jax.random.normal(ks[5], (C,), jnp.float32) * 0.1
    var1   = jax.random.uniform(ks[6], (C,), jnp.float32, 0.5, 1.5)
    gamma2 = jax.random.uniform(ks[7], (C,), jnp.float32, 0.5, 1.5)
    beta2  = jax.random.normal(ks[8], (C,), jnp.float32) * 0.1
    mean2  = jax.random.normal(ks[9], (C,), jnp.float32) * 0.1
    var2   = jax.random.uniform(ks[10], (C,), jnp.float32, 0.5, 1.5)

    fwd = jax.jit(residual_block)
    out = fwd(x, w1, gamma1, beta1, mean1, var1,
              w2, gamma2, beta2, mean2, var2)
    out = jax.block_until_ready(out)

    ref = _reference(x, w1, gamma1, beta1, mean1, var1,
                     w2, gamma2, beta2, mean2, var2)
    assert out.shape == (B, C, H, W)
    # bf16 MXU operands + bf16 h1 / output => small quantization error vs the
    # pure-f32 reference; 5e-2 still catches structural bugs (O(1) diffs).
    assert jnp.allclose(out, ref, atol=5e-2, rtol=5e-2), "mismatch vs reference"

    print("KERNEL_OK")
</pallas_src>

<mosaic_0001>
module attributes {stable_mosaic.version = 11 : i64} {
  func.func @residual_block_kernel(%arg0: i32, %arg1: memref<1x18x256xbf16, #tpu.memory_space<vmem>>, %arg2: memref<3x256x256xbf16, #tpu.memory_space<vmem>>, %arg3: memref<1x256xf32, #tpu.memory_space<vmem>>, %arg4: memref<1x256xf32, #tpu.memory_space<vmem>>, %arg5: memref<3x256x256xbf16, #tpu.memory_space<vmem>>, %arg6: memref<1x256xf32, #tpu.memory_space<vmem>>, %arg7: memref<1x256xf32, #tpu.memory_space<vmem>>, %arg8: memref<1x16x256xbf16, #tpu.memory_space<vmem>>, %arg9: memref<1x33x256xbf16, #tpu.memory_space<vmem>>) attributes {dimension_semantics = [#tpu.dimension_semantics<parallel>], iteration_bounds = array<i64: 2>, scalar_prefetch = 0 : i64, scratch_operands = 1 : i64, tpu.core_type = #tpu.core_type<tc>, window_params = [{transform_indices = @transform_0, window_bounds = array<i64: 1, 18, 256>}, {pipeline_mode = #tpu.pipeline_mode<synchronous>, transform_indices = @transform_1, window_bounds = array<i64: 3, 256, 256>}, {pipeline_mode = #tpu.pipeline_mode<synchronous>, transform_indices = @transform_2, window_bounds = array<i64: 1, 256>}, {pipeline_mode = #tpu.pipeline_mode<synchronous>, transform_indices = @transform_3, window_bounds = array<i64: 1, 256>}, {pipeline_mode = #tpu.pipeline_mode<synchronous>, transform_indices = @transform_4, window_bounds = array<i64: 3, 256, 256>}, {pipeline_mode = #tpu.pipeline_mode<synchronous>, transform_indices = @transform_5, window_bounds = array<i64: 1, 256>}, {pipeline_mode = #tpu.pipeline_mode<synchronous>, transform_indices = @transform_6, window_bounds = array<i64: 1, 256>}, {transform_indices = @transform_7, window_bounds = array<i64: 1, 16, 256>}]} {
    %c0 = arith.constant 0 : index
    %c1 = arith.constant 1 : index
    %c0_0 = arith.constant 0 : index
    %0 = vector.load %arg1[%c0, %c1, %c0_0] : memref<1x18x256xbf16, #tpu.memory_space<vmem>>, vector<1x16x256xbf16>
    %1 = vector.shape_cast %0 : vector<1x16x256xbf16> to vector<16x256xbf16>
    %c0_1 = arith.constant 0 : index
    %c0_2 = arith.constant 0 : index
    %c0_3 = arith.constant 0 : index
    %2 = vector.load %arg1[%c0_1, %c0_2, %c0_3] : memref<1x18x256xbf16, #tpu.memory_space<vmem>>, vector<1x16x256xbf16>
    %3 = vector.shape_cast %2 : vector<1x16x256xbf16> to vector<16x256xbf16>
    %c0_4 = arith.constant 0 : index
    %c0_5 = arith.constant 0 : index
    %c0_6 = arith.constant 0 : index
    %4 = vector.load %arg2[%c0_4, %c0_5, %c0_6] : memref<3x256x256xbf16, #tpu.memory_space<vmem>>, vector<1x256x256xbf16>
    %5 = vector.shape_cast %4 : vector<1x256x256xbf16> to vector<256x256xbf16>
    %cst = arith.constant dense<0.000000e+00> : vector<16x256xf32>
    %6 = tpu.matmul %3, %5, %cst {dimension_numbers = #tpu.dot_dimension_numbers<[1], [0], [0], [1], [0, 0, 1, 1], [], []>} : vector<16x256xbf16>, vector<256x256xbf16>, vector<16x256xf32> -> vector<16x256xf32>
    %c1_7 = arith.constant 1 : index
    %c0_8 = arith.constant 0 : index
    %c0_9 = arith.constant 0 : index
    %7 = vector.load %arg2[%c1_7, %c0_8, %c0_9] : memref<3x256x256xbf16, #tpu.memory_space<vmem>>, vector<1x256x256xbf16>
    %8 = vector.shape_cast %7 : vector<1x256x256xbf16> to vector<256x256xbf16>
    %cst_10 = arith.constant dense<0.000000e+00> : vector<16x256xf32>
    %9 = tpu.matmul %1, %8, %cst_10 {dimension_numbers = #tpu.dot_dimension_numbers<[1], [0], [0], [1], [0, 0, 1, 1], [], []>} : vector<16x256xbf16>, vector<256x256xbf16>, vector<16x256xf32> -> vector<16x256xf32>
    %10 = arith.addf %6, %9 : vector<16x256xf32>
    %c0_11 = arith.constant 0 : index
    %c2 = arith.constant 2 : index
    %c0_12 = arith.constant 0 : index
    %11 = vector.load %arg1[%c0_11, %c2, %c0_12] : memref<1x18x256xbf16, #tpu.memory_space<vmem>>, vector<1x16x256xbf16>
    %12 = vector.shape_cast %11 : vector<1x16x256xbf16> to vector<16x256xbf16>
    %c2_13 = arith.constant 2 : index
    %c0_14 = arith.constant 0 : index
    %c0_15 = arith.constant 0 : index
    %13 = vector.load %arg2[%c2_13, %c0_14, %c0_15] : memref<3x256x256xbf16, #tpu.memory_space<vmem>>, vector<1x256x256xbf16>
    %14 = vector.shape_cast %13 : vector<1x256x256xbf16> to vector<256x256xbf16>
    %cst_16 = arith.constant dense<0.000000e+00> : vector<16x256xf32>
    %15 = tpu.matmul %12, %14, %cst_16 {dimension_numbers = #tpu.dot_dimension_numbers<[1], [0], [0], [1], [0, 0, 1, 1], [], []>} : vector<16x256xbf16>, vector<256x256xbf16>, vector<16x256xf32> -> vector<16x256xf32>
    %16 = arith.addf %10, %15 : vector<16x256xf32>
    %c0_17 = arith.constant 0 : index
    %c0_18 = arith.constant 0 : index
    %17 = vector.load %arg3[%c0_17, %c0_18] : memref<1x256xf32, #tpu.memory_space<vmem>>, vector<1x256xf32>
    %18 = vector.broadcast %17 : vector<1x256xf32> to vector<16x256xf32>
    %19 = arith.mulf %16, %18 : vector<16x256xf32>
    %c0_19 = arith.constant 0 : index
    %c0_20 = arith.constant 0 : index
    %20 = vector.load %arg4[%c0_19, %c0_20] : memref<1x256xf32, #tpu.memory_space<vmem>>, vector<1x256xf32>
    %21 = vector.broadcast %20 : vector<1x256xf32> to vector<16x256xf32>
    %22 = arith.addf %19, %21 : vector<16x256xf32>
    %cst_21 = arith.constant 0.000000e+00 : f32
    %23 = vector.broadcast %cst_21 : f32 to vector<16x256xf32>
    %24 = arith.maximumf %22, %23 : vector<16x256xf32>
    %25 = arith.truncf %24 : vector<16x256xf32> to vector<16x256xbf16>
    %cst_22 = arith.constant 0.000000e+00 : bf16
    %26 = vector.broadcast %cst_22 : bf16 to vector<1x1x256xbf16>
    %c0_23 = arith.constant 0 : index
    %c15 = arith.constant 15 : index
    %c0_24 = arith.constant 0 : index
    %27 = vector.load %arg9[%c0_23, %c15, %c0_24] : memref<1x33x256xbf16, #tpu.memory_space<vmem>>, vector<1x1x256xbf16>
    tpu.vector_store %arg9[%c0_23, %c15, %c0_24], %26 {strides = array<i32>} : memref<1x33x256xbf16, #tpu.memory_space<vmem>>, vector<1x1x256xbf16>,
    %c0_25 = arith.constant 0 : index
    %c32 = arith.constant 32 : index
    %c0_26 = arith.constant 0 : index
    %28 = vector.load %arg9[%c0_25, %c32, %c0_26] : memref<1x33x256xbf16, #tpu.memory_space<vmem>>, vector<1x1x256xbf16>
    tpu.vector_store %arg9[%c0_25, %c32, %c0_26], %26 {strides = array<i32>} : memref<1x33x256xbf16, #tpu.memory_space<vmem>>, vector<1x1x256xbf16>,
    %29 = vector.shape_cast %25 : vector<16x256xbf16> to vector<1x16x256xbf16>
    %c0_27 = arith.constant 0 : index
    %c16 = arith.constant 16 : index
    %c0_28 = arith.constant 0 : index
    %30 = vector.load %arg9[%c0_27, %c16, %c0_28] : memref<1x33x256xbf16, #tpu.memory_space<vmem>>, vector<1x16x256xbf16>
    tpu.vector_store %arg9[%c0_27, %c16, %c0_28], %29 {strides = array<i32>} : memref<1x33x256xbf16, #tpu.memory_space<vmem>>, vector<1x16x256xbf16>,
    %c0_29 = arith.constant 0 : index
    %c15_30 = arith.constant 15 : index
    %c0_31 = arith.constant 0 : index
    %31 = vector.load %arg9[%c0_29, %c15_30, %c0_31] : memref<1x33x256xbf16, #tpu.memory_space<vmem>>, vector<1x16x256xbf16>
    %32 = vector.shape_cast %31 : vector<1x16x256xbf16> to vector<16x256xbf16>
    %c0_32 = arith.constant 0 : index
    %c0_33 = arith.constant 0 : index
    %c0_34 = arith.constant 0 : index
    %33 = vector.load %arg5[%c0_32, %c0_33, %c0_34] : memref<3x256x256xbf16, #tpu.memory_space<vmem>>, vector<1x256x256xbf16>
    %34 = vector.shape_cast %33 : vector<1x256x256xbf16> to vector<256x256xbf16>
    %cst_35 = arith.constant dense<0.000000e+00> : vector<16x256xf32>
    %35 = tpu.matmul %32, %34, %cst_35 {dimension_numbers = #tpu.dot_dimension_numbers<[1], [0], [0], [1], [0, 0, 1, 1], [], []>} : vector<16x256xbf16>, vector<256x256xbf16>, vector<16x256xf32> -> vector<16x256xf32>
    %c1_36 = arith.constant 1 : index
    %c0_37 = arith.constant 0 : index
    %c0_38 = arith.constant 0 : index
    %36 = vector.load %arg5[%c1_36, %c0_37, %c0_38] : memref<3x256x256xbf16, #tpu.memory_space<vmem>>, vector<1x256x256xbf16>
    %37 = vector.shape_cast %36 : vector<1x256x256xbf16> to vector<256x256xbf16>
    %cst_39 = arith.constant dense<0.000000e+00> : vector<16x256xf32>
    %38 = tpu.matmul %25, %37, %cst_39 {dimension_numbers = #tpu.dot_dimension_numbers<[1], [0], [0], [1], [0, 0, 1, 1], [], []>} : vector<16x256xbf16>, vector<256x256xbf16>, vector<16x256xf32> -> vector<16x256xf32>
    %39 = arith.addf %35, %38 : vector<16x256xf32>
    %c0_40 = arith.constant 0 : index
    %c17 = arith.constant 17 : index
    %c0_41 = arith.constant 0 : index
    %40 = vector.load %arg9[%c0_40, %c17, %c0_41] : memref<1x33x256xbf16, #tpu.memory_space<vmem>>, vector<1x16x256xbf16>
    %41 = vector.shape_cast %40 : vector<1x16x256xbf16> to vector<16x256xbf16>
    %c2_42 = arith.constant 2 : index
    %c0_43 = arith.constant 0 : index
    %c0_44 = arith.constant 0 : index
    %42 = vector.load %arg5[%c2_42, %c0_43, %c0_44] : memref<3x256x256xbf16, #tpu.memory_space<vmem>>, vector<1x256x256xbf16>
    %43 = vector.shape_cast %42 : vector<1x256x256xbf16> to vector<256x256xbf16>
    %cst_45 = arith.constant dense<0.000000e+00> : vector<16x256xf32>
    %44 = tpu.matmul %41, %43, %cst_45 {dimension_numbers = #tpu.dot_dimension_numbers<[1], [0], [0], [1], [0, 0, 1, 1], [], []>} : vector<16x256xbf16>, vector<256x256xbf16>, vector<16x256xf32> -> vector<16x256xf32>
    %45 = arith.addf %39, %44 : vector<16x256xf32>
    %c0_46 = arith.constant 0 : index
    %c0_47 = arith.constant 0 : index
    %46 = vector.load %arg6[%c0_46, %c0_47] : memref<1x256xf32, #tpu.memory_space<vmem>>, vector<1x256xf32>
    %47 = vector.broadcast %46 : vector<1x256xf32> to vector<16x256xf32>
    %48 = arith.mulf %45, %47 : vector<16x256xf32>
    %c0_48 = arith.constant 0 : index
    %c0_49 = arith.constant 0 : index
    %49 = vector.load %arg7[%c0_48, %c0_49] : memref<1x256xf32, #tpu.memory_space<vmem>>, vector<1x256xf32>
    %50 = vector.broadcast %49 : vector<1x256xf32> to vector<16x256xf32>
    %51 = arith.addf %48, %50 : vector<16x256xf32>
    %52 = arith.extf %1 : vector<16x256xbf16> to vector<16x256xf32>
    %53 = arith.addf %51, %52 : vector<16x256xf32>
    %cst_50 = arith.constant 0.000000e+00 : f32
    %54 = vector.broadcast %cst_50 : f32 to vector<16x256xf32>
    %55 = arith.maximumf %53, %54 : vector<16x256xf32>
    %56 = vector.shape_cast %55 : vector<16x256xf32> to vector<1x16x256xf32>
    %57 = arith.truncf %56 : vector<1x16x256xf32> to vector<1x16x256xbf16>
    %c0_51 = arith.constant 0 : index
    %c0_52 = arith.constant 0 : index
    %c0_53 = arith.constant 0 : index
    %58 = vector.load %arg8[%c0_51, %c0_52, %c0_53] : memref<1x16x256xbf16, #tpu.memory_space<vmem>>, vector<1x16x256xbf16>
    tpu.vector_store %arg8[%c0_51, %c0_52, %c0_53], %57 {strides = array<i32>} : memref<1x16x256xbf16, #tpu.memory_space<vmem>>, vector<1x16x256xbf16>,
    return
  }
  func.func @transform_0(%arg0: i32) -> (i32, i32, i32) {
    %c0_i32 = arith.constant 0 : i32
    %c0_i32_0 = arith.constant 0 : i32
    %c0_i32_1 = arith.constant 0 : i32
    return %arg0, %c0_i32, %c0_i32_0 : i32, i32, i32
  }
  func.func @transform_1(%arg0: i32) -> (i32, i32, i32) {
    %c0_i32 = arith.constant 0 : i32
    %c0_i32_0 = arith.constant 0 : i32
    %c0_i32_1 = arith.constant 0 : i32
    %c0_i32_2 = arith.constant 0 : i32
    return %c0_i32, %c0_i32_0, %c0_i32_1 : i32, i32, i32
  }
  func.func @transform_2(%arg0: i32) -> (i32, i32) {
    %c0_i32 = arith.constant 0 : i32
    %c0_i32_0 = arith.constant 0 : i32
    %c0_i32_1 = arith.constant 0 : i32
    return %c0_i32, %c0_i32_0 : i32, i32
  }
  func.func @transform_3(%arg0: i32) -> (i32, i32) {
    %c0_i32 = arith.constant 0 : i32
    %c0_i32_0 = arith.constant 0 : i32
    %c0_i32_1 = arith.constant 0 : i32
    return %c0_i32, %c0_i32_0 : i32, i32
  }
  func.func @transform_4(%arg0: i32) -> (i32, i32, i32) {
    %c0_i32 = arith.constant 0 : i32
    %c0_i32_0 = arith.constant 0 : i32
    %c0_i32_1 = arith.constant 0 : i32
    %c0_i32_2 = arith.constant 0 : i32
    return %c0_i32, %c0_i32_0, %c0_i32_1 : i32, i32, i32
  }
  func.func @transform_5(%arg0: i32) -> (i32, i32) {
    %c0_i32 = arith.constant 0 : i32
    %c0_i32_0 = arith.constant 0 : i32
    %c0_i32_1 = arith.constant 0 : i32
    return %c0_i32, %c0_i32_0 : i32, i32
  }
  func.func @transform_6(%arg0: i32) -> (i32, i32) {
    %c0_i32 = arith.constant 0 : i32
    %c0_i32_0 = arith.constant 0 : i32
    %c0_i32_1 = arith.constant 0 : i32
    return %c0_i32, %c0_i32_0 : i32, i32
  }
  func.func @transform_7(%arg0: i32) -> (i32, i32, i32) {
    %c0_i32 = arith.constant 0 : i32
    %c0_i32_0 = arith.constant 0 : i32
    %c0_i32_1 = arith.constant 0 : i32
    return %arg0, %c0_i32, %c0_i32_0 : i32, i32, i32
  }
}

</mosaic_0001>

<llo_original>
// kernel: tile.23
$region0: #{tile.23}
  #allocation0 [shape = 's32[1]{0}', space=sflag, size = 0x4, scoped, tag = 'scoped memory for tile.23']
  %s0 = inlined_call_operand.vmem [shape: f32[16], index: 0, kind: input, shape index: {}]
  %s1 = inlined_call_operand.vmem [shape: f32[16,16], index: 1, kind: output, shape index: {}]
  // Predicated region
  $region2: #{tile.23} parent=0 // pred_check
    _
  $region3: #{tile.23} parent=0 // pred_check_branch
    %3 = sbr.rel (0) target = $region5
  $region4: #{tile.23} parent=0 // pred_region
    _
  $region5: #{tile.23} parent=0 // pred_fallthru
    _
  %v4 = vld [vmem:[%s0] ss:$0 sm:$0xff]
  %5 = vst [vmem:[%s1] sm:$0xff] %v4
  %s6 = scalar_lea.vmem %s1, 8
  %7 = vst [vmem:[%s6] sm:$0xff] %v4

// kernel: tile.24
$region0: #{tile.24}
  %s0 = inlined_call_operand.vmem [shape: f32[16,16], index: 0, kind: input, shape index: {}]
  %s1 = inlined_call_operand.vmem [shape: f32[1,256], index: 1, kind: output, shape index: {}]
  $region1: #{tile.24} parent=0
    #allocation0 [shape = 'u8[8192]{0}', space=vmem, size = 0x2000, scoped, tag = 'scoped mem for output reshape']
    %s2 = smov 3
    %v3 = vld [vmem:[%s0] ss:$8 sm:%s2]
    %vm4 = vcmask 130048
    %5 = vst.msk [vmem:[#allocation0] ss:$8 sm:$0x3] %vm4, %v3
    %s6 = scalar_lea.vmem %s0, 7
    %s7 = smov 3
    %v8 = vld [vmem:[%s6] ss:$8 sm:%s7]
    %9 = vrot.lane.b32.xlu0 %v8, 112
    %v10 = vpop.permute.xlu0 %9
    %vm11 = vcmask 1048448
    %12 = vst.msk [vmem:[#allocation0] ss:$8 sm:$0x3] %vm11, %v10
    %s13 = scalar_lea.vmem %s0, 6
    %s14 = smov 3
    %v15 = vld [vmem:[%s13] ss:$8 sm:%s14]
    %16 = vrot.lane.b32.xlu0 %v15, 96
    %v17 = vpop.permute.xlu0 %16
    %vm18 = vcmask 917248
    %19 = vst.msk [vmem:[#allocation0] ss:$8 sm:$0x3] %vm18, %v17
    %s20 = scalar_lea.vmem %s0, 5
    %s21 = smov 3
    %v22 = vld [vmem:[%s20] ss:$8 sm:%s21]
    %23 = vrot.lane.b32.xlu0 %v22, 80
    %v24 = vpop.permute.xlu0 %23
    %vm25 = vcmask 786048
    %26 = vst.msk [vmem:[#allocation0] ss:$8 sm:$0x3] %vm25, %v24
    %s27 = scalar_lea.vmem %s0, 4
    %s28 = smov 3
    %v29 = vld [vmem:[%s27] ss:$8 sm:%s28]
    %30 = vrot.lane.b32.xlu0 %v29, 64
    %v31 = vpop.permute.xlu0 %30
    %vm32 = vcmask 654848
    %33 = vst.msk [vmem:[#allocation0] ss:$8 sm:$0x3] %vm32, %v31
    %s34 = scalar_lea.vmem %s0, 3
    %s35 = smov 3
    %v36 = vld [vmem:[%s34] ss:$8 sm:%s35]
    %37 = vrot.lane.b32.xlu0 %v36, 48
    %v38 = vpop.permute.xlu0 %37
    %vm39 = vcmask 523648
    %40 = vst.msk [vmem:[#allocation0] ss:$8 sm:$0x3] %vm39, %v38
    %s41 = scalar_lea.vmem %s0, 2
    %s42 = smov 3
    %v43 = vld [vmem:[%s41] ss:$8 sm:%s42]
    %44 = vrot.lane.b32.xlu0 %v43, 32
    %v45 = vpop.permute.xlu0 %44
    %vm46 = vcmask 392448
    %47 = vst.msk [vmem:[#allocation0] ss:$8 sm:$0x3] %vm46, %v45
    %s48 = scalar_lea.vmem %s0, 1
    %s49 = smov 3
    %v50 = vld [vmem:[%s48] ss:$8 sm:%s49]
    %51 = vrot.lane.b32.xlu0 %v50, 16
    %v52 = vpop.permute.xlu0 %51
    %vm53 = vcmask 261248
    %54 = vst.msk [vmem:[#allocation0] ss:$8 sm:$0x3] %vm53, %v52
    %s56 = sshllo.u32 0, 1
    %v58 = vld [vmem:[#allocation0] sm:%s56]
    %s59 = sshllo.u32 0, 1
    %60 = vst [vmem:[%s1] sm:%s59] %v58
    %s61 = scalar_lea.vmem [#allocation0], 8
    %v62 = vld [vmem:[%s61] sm:%s56]
    %s63 = sshllo.u32 0, 1
    %s64 = scalar_lea.vmem %s1, 1
    %65 = vst [vmem:[%s64] sm:%s63] %v62

// kernel: residual_block.1
$region0: #{residual_block.1}
  #allocation0 [shape = 'u32[]', space=smem, size = 0x4, offset = 0x4, fixed_abs, tag = 'smem constant byte address 0x4 - core index']
  #allocation1 [shape = 'u32[144,128]{1,0:T(1,128)}', space=vmem, size = 0x12000, scoped, tag = 'internal scratch']
  #allocation2 [shape = 'bf16[1,33,256]{2,1,0:T(8,128)(2,1)}', space=vmem, size = 0x5000, scoped, tag = 'scratch operand']
  %s0 = inlined_call_operand.vmem [shape: bf16[2,18,256], index: 0, kind: input, shape index: {}]
  %s1 = inlined_call_operand.vmem [shape: bf16[3,256,256], index: 1, kind: input, shape index: {}]
  %s2 = inlined_call_operand.vmem [shape: f32[1,256], index: 2, kind: input, shape index: {}]
  %s3 = inlined_call_operand.vmem [shape: f32[1,256], index: 3, kind: input, shape index: {}]
  %s4 = inlined_call_operand.vmem [shape: bf16[3,256,256], index: 4, kind: input, shape index: {}]
  %s5 = inlined_call_operand.vmem [shape: f32[1,256], index: 5, kind: input, shape index: {}]
  %s6 = inlined_call_operand.vmem [shape: f32[1,256], index: 6, kind: input, shape index: {}]
  %s7 = inlined_call_operand.vmem [shape: bf16[2,16,256], index: 7, kind: output, shape index: {}]
  %s8 = sld [smem:[#allocation0]]
  $region61: #{residual_block.1} parent=0
    _
  %s10 = ssub.s32 1, %s8
  %s11 = scalar_select 0, %s10, %s8
  loop: start=0, step=1, limit=4
  $region2: #{residual_block.1} parent=0 // loop_pre_header
    _
  $region3: #{residual_block.1} parent=0 // loop_header
    %s13 = sphi 0, %s17
    %p14 = scmp.ge.s32.totalorder %s13, 4
    %s23 = sphi 0, %s25
    %s26 = sphi 0, %s23
    %s27 = sphi 0, %s26
    %s43 = sphi 0, %s27
    %s47 = sphi 0, %s47
    %s49 = sphi 0, %s47
    %s50 = sphi 0, %s49
    %s64 = sphi 0, %s50
    %s68 = sphi 0, %s68
    %s70 = sphi 0, %s68
    %s71 = sphi 0, %s70
    %s85 = sphi 0, %s71
    %s89 = sphi 0, %s89
    %s91 = sphi 0, %s89
    %s92 = sphi 0, %s91
    %s106 = sphi 0, %s92
    %s110 = sphi 0, %s110
    %s112 = sphi 0, %s110
    %s113 = sphi 0, %s112
    %s127 = sphi 0, %s113
    %s131 = sphi 0, %s131
    %s133 = sphi 0, %s131
    %s134 = sphi 0, %s133
    %s148 = sphi 0, %s134
    %s152 = sphi 0, %s152
    %s154 = sphi 0, %s152
    %s155 = sphi 0, %s154
    %s169 = sphi 0, %s155
    %s175 = sphi 0, %s177
    %s178 = sphi 0, %s175
    %s179 = sphi 0, %s178
    %s195 = sphi 0, %s179
  $region4: #{residual_block.1} parent=0 // loop_header_branch
    %16 = sbr.rel (%p14) target = $region8
  $region5: #{residual_block.1} parent=0 // loop_body
    %s18 = ssub.s32 %s13, 1
    %s19 = ssub.s32 %s13, 2
    %s20 = sadd.s32 %s13, 1
    %s21 = ssub.s32 %s13, %s20
    %p22 = scmp.eq.s32.totalorder %s21, 0
    %s24 = sadd.s32 %s23, 1
    %s25 = scalar_select %p22, %s23, %s24
    %p28 = pneg %p22
    %p29 = scmp.eq.s32.totalorder %s13, 1
    %p30 = por %p28, %p29
    %p31 = scmp.ne.s32.totalorder %s23, %s26
    %p32 = scmp.eq.s32.totalorder %s13, 0
    %p33 = por %p31, %p32
    %p34 = scmp.ne.s32.totalorder %s23, %s26
    %p35 = scmp.eq.s32.totalorder %s18, 1
    %p36 = por %p34, %p35
    %p37 = scmp.ne.s32.totalorder %s26, %s27
    %p38 = scmp.eq.s32.totalorder %s18, 0
    %p39 = por %p37, %p38
    %p40 = scmp.ne.s32.totalorder %s26, %s27
    %p41 = scmp.eq.s32.totalorder %s19, 1
    %p42 = por %p40, %p41
    %p44 = scmp.ne.s32.totalorder %s27, %s43
    %p45 = scmp.eq.s32.totalorder %s19, 0
    %p46 = por %p44, %p45
    %s48 = sadd.s32 %s47, 1
    %p51 = scmp.eq.s32.totalorder %s13, 1
    %p52 = scmp.ne.s32.totalorder %s47, %s49
    %p53 = scmp.eq.s32.totalorder %s13, 0
    %p54 = por %p52, %p53
    %p55 = scmp.ne.s32.totalorder %s47, %s49
    %p56 = scmp.eq.s32.totalorder %s18, 1
    %p57 = por %p55, %p56
    %p58 = scmp.ne.s32.totalorder %s49, %s50
    %p59 = scmp.eq.s32.totalorder %s18, 0
    %p60 = por %p58, %p59
    %p61 = scmp.ne.s32.totalorder %s49, %s50
    %p62 = scmp.eq.s32.totalorder %s19, 1
    %p63 = por %p61, %p62
    %p65 = scmp.ne.s32.totalorder %s50, %s64
    %p66 = scmp.eq.s32.totalorder %s19, 0
    %p67 = por %p65, %p66
    %s69 = sadd.s32 %s68, 1
    %p72 = scmp.eq.s32.totalorder %s13, 1
    %p73 = scmp.ne.s32.totalorder %s68, %s70
    %p74 = scmp.eq.s32.totalorder %s13, 0
    %p75 = por %p73, %p74
    %p76 = scmp.ne.s32.totalorder %s68, %s70
    %p77 = scmp.eq.s32.totalorder %s18, 1
    %p78 = por %p76, %p77
    %p79 = scmp.ne.s32.totalorder %s70, %s71
    %p80 = scmp.eq.s32.totalorder %s18, 0
    %p81 = por %p79, %p80
    %p82 = scmp.ne.s32.totalorder %s70, %s71
    %p83 = scmp.eq.s32.totalorder %s19, 1
    %p84 = por %p82, %p83
    %p86 = scmp.ne.s32.totalorder %s71, %s85
    %p87 = scmp.eq.s32.totalorder %s19, 0
    %p88 = por %p86, %p87
    %s90 = sadd.s32 %s89, 1
    %p93 = scmp.eq.s32.totalorder %s13, 1
    %p94 = scmp.ne.s32.totalorder %s89, %s91
    %p95 = scmp.eq.s32.totalorder %s13, 0
    %p96 = por %p94, %p95
    %p97 = scmp.ne.s32.totalorder %s89, %s91
    %p98 = scmp.eq.s32.totalorder %s18, 1
    %p99 = por %p97, %p98
    %p100 = scmp.ne.s32.totalorder %s91, %s92
    %p101 = scmp.eq.s32.totalorder %s18, 0
    %p102 = por %p100, %p101
    %p103 = scmp.ne.s32.totalorder %s91, %s92
    %p104 = scmp.eq.s32.totalorder %s19, 1
    %p105 = por %p103, %p104
    %p107 = scmp.ne.s32.totalorder %s92, %s106
    %p108 = scmp.eq.s32.totalorder %s19, 0
    %p109 = por %p107, %p108
    %s111 = sadd.s32 %s110, 1
    %p114 = scmp.eq.s32.totalorder %s13, 1
    %p115 = scmp.ne.s32.totalorder %s110, %s112
    %p116 = scmp.eq.s32.totalorder %s13, 0
    %p117 = por %p115, %p116
    %p118 = scmp.ne.s32.totalorder %s110, %s112
    %p119 = scmp.eq.s32.totalorder %s18, 1
    %p120 = por %p118, %p119
    %p121 = scmp.ne.s32.totalorder %s112, %s113
    %p122 = scmp.eq.s32.totalorder %s18, 0
    %p123 = por %p121, %p122
    %p124 = scmp.ne.s32.totalorder %s112, %s113
    %p125 = scmp.eq.s32.totalorder %s19, 1
    %p126 = por %p124, %p125
    %p128 = scmp.ne.s32.totalorder %s113, %s127
    %p129 = scmp.eq.s32.totalorder %s19, 0
    %p130 = por %p128, %p129
    %s132 = sadd.s32 %s131, 1
    %p135 = scmp.eq.s32.totalorder %s13, 1
    %p136 = scmp.ne.s32.totalorder %s131, %s133
    %p137 = scmp.eq.s32.totalorder %s13, 0
    %p138 = por %p136, %p137
    %p139 = scmp.ne.s32.totalorder %s131, %s133
    %p140 = scmp.eq.s32.totalorder %s18, 1
    %p141 = por %p139, %p140
    %p142 = scmp.ne.s32.totalorder %s133, %s134
    %p143 = scmp.eq.s32.totalorder %s18, 0
    %p144 = por %p142, %p143
    %p145 = scmp.ne.s32.totalorder %s133, %s134
    %p146 = scmp.eq.s32.totalorder %s19, 1
    %p147 = por %p145, %p146
    %p149 = scmp.ne.s32.totalorder %s134, %s148
    %p150 = scmp.eq.s32.totalorder %s19, 0
    %p151 = por %p149, %p150
    %s153 = sadd.s32 %s152, 1
    %p156 = scmp.eq.s32.totalorder %s13, 1
    %p157 = scmp.ne.s32.totalorder %s152, %s154
    %p158 = scmp.eq.s32.totalorder %s13, 0
    %p159 = por %p157, %p158
    %p160 = scmp.ne.s32.totalorder %s152, %s154
    %p161 = scmp.eq.s32.totalorder %s18, 1
    %p162 = por %p160, %p161
    %p163 = scmp.ne.s32.totalorder %s154, %s155
    %p164 = scmp.eq.s32.totalorder %s18, 0
    %p165 = por %p163, %p164
    %p166 = scmp.ne.s32.totalorder %s154, %s155
    %p167 = scmp.eq.s32.totalorder %s19, 1
    %p168 = por %p166, %p167
    %p170 = scmp.ne.s32.totalorder %s155, %s169
    %p171 = scmp.eq.s32.totalorder %s19, 0
    %p172 = por %p170, %p171
    %s173 = ssub.s32 %s13, %s20
    %p174 = scmp.eq.s32.totalorder %s173, 0
    %s176 = sadd.s32 %s175, 1
    %s177 = scalar_select %p174, %s175, %s176
    %p180 = pneg %p174
    %p181 = scmp.eq.s32.totalorder %s13, 1
    %p182 = por %p180, %p181
    %p183 = scmp.ne.s32.totalorder %s175, %s178
    %p184 = scmp.eq.s32.totalorder %s13, 0
    %p185 = por %p183, %p184
    %p186 = scmp.ne.s32.totalorder %s175, %s178
    %p187 = scmp.eq.s32.totalorder %s18, 1
    %p188 = por %p186, %p187
    %p189 = scmp.ne.s32.totalorder %s178, %s179
    %p190 = scmp.eq.s32.totalorder %s18, 0
    %p191 = por %p189, %p190
    %p192 = scmp.ne.s32.totalorder %s178, %s179
    %p193 = scmp.eq.s32.totalorder %s19, 1
    %p194 = por %p192, %p193
    %p196 = scmp.ne.s32.totalorder %s179, %s195
    %p197 = scmp.eq.s32.totalorder %s19, 0
    %p198 = por %p196, %p197
    %p199 = scmp.le.s32.totalorder 1, %s13
    %p200 = scmp.lt.s32.totalorder %s13, 3
    %p201 = pnand %p199, %p200
    %p202 = pneg %p201
    // Predicated region
    $region9: #{residual_block.1} parent=5 // pred_check
      _
    $region10: #{residual_block.1} parent=5 // pred_check_branch
      %204 = sbr.rel (%p201) target = $region12
    $region11: #{residual_block.1} parent=5 // pred_region
      %s205 = ssub.s32 %s13, 1
      // Predicated region
      $region13: #{residual_block.1} parent=11 // pred_check
        %p206 = pneg %p60
      $region14: #{residual_block.1} parent=11 // pred_check_branch
        %208 = sbr.rel (%p206) target = $region16
      $region15: #{residual_block.1} parent=11 // pred_region
        _
      $region16: #{residual_block.1} parent=11 // pred_fallthru
        _
      // Predicated region
      $region17: #{residual_block.1} parent=11 // pred_check
        %p209 = pneg %p81
      $region18: #{residual_block.1} parent=11 // pred_check_branch
        %211 = sbr.rel (%p209) target = $region20
      $region19: #{residual_block.1} parent=11 // pred_region
        _
      $region20: #{residual_block.1} parent=11 // pred_fallthru
        _
      // Predicated region
      $region21: #{residual_block.1} parent=11 // pred_check
        %p212 = pneg %p102
      $region22: #{residual_block.1} parent=11 // pred_check_branch
        %214 = sbr.rel (%p212) target = $region24
      $region23: #{residual_block.1} parent=11 // pred_region
        _
      $region24: #{residual_block.1} parent=11 // pred_fallthru
        _
      // Predicated region
      $region25: #{residual_block.1} parent=11 // pred_check
        %p215 = pneg %p123
      $region26: #{residual_block.1} parent=11 // pred_check_branch
        %217 = sbr.rel (%p215) target = $region28
      $region27: #{residual_block.1} parent=11 // pred_region
        _
      $region28: #{residual_block.1} parent=11 // pred_fallthru
        _
      // Predicated region
      $region29: #{residual_block.1} parent=11 // pred_check
        %p218 = pneg %p144
      $region30: #{residual_block.1} parent=11 // pred_check_branch
        %220 = sbr.rel (%p218) target = $region32
      $region31: #{residual_block.1} parent=11 // pred_region
        _
      $region32: #{residual_block.1} parent=11 // pred_fallthru
        _
      // Predicated region
      $region33: #{residual_block.1} parent=11 // pred_check
        %p221 = pneg %p165
      $region34: #{residual_block.1} parent=11 // pred_check_branch
        %223 = sbr.rel (%p221) target = $region36
      $region35: #{residual_block.1} parent=11 // pred_region
        _
      $region36: #{residual_block.1} parent=11 // pred_fallthru
        _
    $region12: #{residual_block.1} parent=5 // pred_fallthru
      _
    %p224 = scmp.lt.s32.totalorder %s13, 2
    // Predicated region
    $region37: #{residual_block.1} parent=5 // pred_check
      %p225 = pneg %p224
    $region38: #{residual_block.1} parent=5 // pred_check_branch
      %227 = sbr.rel (%p225) target = $region40
    $region39: #{residual_block.1} parent=5 // pred_region
      // Predicated region
      $region41: #{residual_block.1} parent=39 // pred_check
        %p228 = pneg %p33
      $region42: #{residual_block.1} parent=39 // pred_check_branch
        %230 = sbr.rel (%p228) target = $region44
      $region43: #{residual_block.1} parent=39 // pred_region
        %p231 = scmp.lt.s32.totalorder %s13, 1
        %s232 = scalar_select %p231, %s13, 1
        %s233 = smul.addr %s232, 6
        %s234 = smul.addr %s233, 4
        %s235 = scalar_lea.vmem %s0, %s234
      $region44: #{residual_block.1} parent=39 // pred_fallthru
        _
    $region40: #{residual_block.1} parent=5 // pred_fallthru
      _
    %p236 = scmp.le.s32.totalorder 1, %s13
    %p237 = scmp.lt.s32.totalorder %s13, 3
    %p238 = pnand %p236, %p237
    %p239 = pneg %p238
    // Predicated region
    $region45: #{residual_block.1} parent=5 // pred_check
      _
    $region46: #{residual_block.1} parent=5 // pred_check_branch
      %241 = sbr.rel (%p238) target = $region48
    $region47: #{residual_block.1} parent=5 // pred_region
      %s242 = ssub.s32 %s13, 1
      %p243 = scmp.lt.s32.totalorder %s18, 1
      %s244 = scalar_select %p243, %s18, 1
      %s245 = smul.addr %s244, 6
      %s246 = smul.addr %s245, 4
      %s247 = scalar_lea.vmem %s0, %s246
      %p248 = pneg %p39
      %p249 = pneg %p36
      %p250 = pneg %p60
      %p251 = pneg %p57
      %p252 = pneg %p81
      %p253 = pneg %p78
      %p254 = pneg %p102
      %p255 = pneg %p99
      %p256 = pneg %p123
      %p257 = pneg %p120
      %p258 = pneg %p144
      %p259 = pneg %p141
      %p260 = pneg %p165
      %p261 = pneg %p162
      %p262 = pneg %p191
      %p263 = pneg %p188
      %p264 = scmp.lt.s32.totalorder %s18, 1
      %s265 = scalar_select %p264, %s18, 1
      %s266 = smul.addr %s265, 4
      %s267 = smul.addr %s266, 4
      %s268 = scalar_lea.vmem %s7, %s267
      %p269 = scmp.lt.s32.totalorder %s18, 1
      %s270 = scalar_select %p269, %s18, 1
      %s271 = smul.addr %s270, 6
      %s272 = smul.addr %s271, 4
      %s273 = scalar_lea.vmem %s0, %s272
      %p274 = scmp.lt.s32.totalorder %s18, 1
      %s275 = scalar_select %p274, %s18, 1
      %s276 = smul.addr %s275, 4
      %s277 = smul.addr %s276, 4
      %s278 = scalar_lea.vmem %s7, %s277
      %v280 = vld [vmem:[%s273] sm:$0xff]
      %v281 = vld [vmem:[%s273 + $0x8] sm:$0xff]
      %v282 = vld [vmem:[%s273 + $0x10] sm:$0x11]
      %v283 = vld [vmem:[%s1] sm:$0xff]
      %v284 = vld [vmem:[%s1 + $0x8] sm:$0xff]
      %v285 = vld [vmem:[%s1 + $0x10] sm:$0xff]
      %v286 = vld [vmem:[%s1 + $0x18] sm:$0xff]
      %v287 = vld [vmem:[%s1 + $0x20] sm:$0xff]
      %v288 = vld [vmem:[%s1 + $0x28] sm:$0xff]
      %v289 = vld [vmem:[%s1 + $0x30] sm:$0xff]
      %v290 = vld [vmem:[%s1 + $0x38] sm:$0xff]
      %v291 = vld [vmem:[%s1 + $0x40] sm:$0xff]
      %v292 = vld [vmem:[%s1 + $0x48] sm:$0xff]
      %v293 = vld [vmem:[%s1 + $0x50] sm:$0xff]
      %v294 = vld [vmem:[%s1 + $0x58] sm:$0xff]
      %v295 = vld [vmem:[%s1 + $0x60] sm:$0xff]
      %v296 = vld [vmem:[%s1 + $0x68] sm:$0xff]
      %v297 = vld [vmem:[%s1 + $0x70] sm:$0xff]
      %v298 = vld [vmem:[%s1 + $0x78] sm:$0xff]
      %v299 = vld [vmem:[%s1 + $0x80] sm:$0xff]
      %v300 = vld [vmem:[%s1 + $0x88] sm:$0xff]
      %v301 = vld [vmem:[%s1 + $0x90] sm:$0xff]
      %v302 = vld [vmem:[%s1 + $0x98] sm:$0xff]
      %v303 = vld [vmem:[%s1 + $0xa0] sm:$0xff]
      %v304 = vld [vmem:[%s1 + $0xa8] sm:$0xff]
      %v305 = vld [vmem:[%s1 + $0xb0] sm:$0xff]
      %v306 = vld [vmem:[%s1 + $0xb8] sm:$0xff]
      %v307 = vld [vmem:[%s1 + $0xc0] sm:$0xff]
      %v308 = vld [vmem:[%s1 + $0xc8] sm:$0xff]
      %v309 = vld [vmem:[%s1 + $0xd0] sm:$0xff]
      %v310 = vld [vmem:[%s1 + $0xd8] sm:$0xff]
      %v311 = vld [vmem:[%s1 + $0xe0] sm:$0xff]
      %v312 = vld [vmem:[%s1 + $0xe8] sm:$0xff]
      %v313 = vld [vmem:[%s1 + $0xf0] sm:$0xff]
      %v314 = vld [vmem:[%s1 + $0xf8] sm:$0xff]
      %s315 = scalar_lea.vmem %s1, 256
      %v316 = vld [vmem:[%s315] sm:$0xff]
      %v317 = vld [vmem:[%s315 + $0x8] sm:$0xff]
      %v318 = vld [vmem:[%s315 + $0x10] sm:$0xff]
      %v319 = vld [vmem:[%s315 + $0x18] sm:$0xff]
      %v320 = vld [vmem:[%s315 + $0x20] sm:$0xff]
      %v321 = vld [vmem:[%s315 + $0x28] sm:$0xff]
      %v322 = vld [vmem:[%s315 + $0x30] sm:$0xff]
      %v323 = vld [vmem:[%s315 + $0x38] sm:$0xff]
      %v324 = vld [vmem:[%s315 + $0x40] sm:$0xff]
      %v325 = vld [vmem:[%s315 + $0x48] sm:$0xff]
      %v326 = vld [vmem:[%s315 + $0x50] sm:$0xff]
      %v327 = vld [vmem:[%s315 + $0x58] sm:$0xff]
      %v328 = vld [vmem:[%s315 + $0x60] sm:$0xff]
      %v329 = vld [vmem:[%s315 + $0x68] sm:$0xff]
      %v330 = vld [vmem:[%s315 + $0x70] sm:$0xff]
      %v331 = vld [vmem:[%s315 + $0x78] sm:$0xff]
      %v332 = vld [vmem:[%s315 + $0x80] sm:$0xff]
      %v333 = vld [vmem:[%s315 + $0x88] sm:$0xff]
      %v334 = vld [vmem:[%s315 + $0x90] sm:$0xff]
      %v335 = vld [vmem:[%s315 + $0x98] sm:$0xff]
      %v336 = vld [vmem:[%s315 + $0xa0] sm:$0xff]
      %v337 = vld [vmem:[%s315 + $0xa8] sm:$0xff]
      %v338 = vld [vmem:[%s315 + $0xb0] sm:$0xff]
      %v339 = vld [vmem:[%s315 + $0xb8] sm:$0xff]
      %v340 = vld [vmem:[%s315 + $0xc0] sm:$0xff]
      %v341 = vld [vmem:[%s315 + $0xc8] sm:$0xff]
      %v342 = vld [vmem:[%s315 + $0xd0] sm:$0xff]
      %v343 = vld [vmem:[%s315 + $0xd8] sm:$0xff]
      %v344 = vld [vmem:[%s315 + $0xe0] sm:$0xff]
      %v345 = vld [vmem:[%s315 + $0xe8] sm:$0xff]
      %v346 = vld [vmem:[%s315 + $0xf0] sm:$0xff]
      %v347 = vld [vmem:[%s315 + $0xf8] sm:$0xff]
      %v351 = vunpack.c.l.b16 %v280
      %v352 = vunpack.c.h.b16 %v280
      %v353 = vunpack.c.l.b16 %v281
      %v354 = vunpack.c.h.b16 %v281
      %v355 = vunpack.c.l.b16 %v282
      %v356 = vunpack.c.h.b16 %v282
      %v357 = vpack.c.b16 %v353, %v351
      %v358 = vpack.c.b16 %v354, %v352
      %v359 = vpack.c.b16 %v355, %v355
      %v360 = vpack.c.b16 %v356, %v356
      %vm361 = vsmask.f32 7424
      %v363 = vshrl.u32 %v357, 16
      %v365 = vshll.u32 %v357, 16
      %v367 = vrot.slane %v365, 1
      %v368 = vor.u32 %v363, %v367
      %v370 = vshll.u32 %v359, 16
      %v372 = vrot.slane %v370, 1
      %v373 = vsel %vm361, %v368, %v372
      %v375 = vshrl.u32 %v358, 16
      %v377 = vshll.u32 %v358, 16
      %v379 = vrot.slane %v377, 1
      %v380 = vor.u32 %v375, %v379
      %v382 = vshll.u32 %v360, 16
      %v384 = vrot.slane %v382, 1
      %v385 = vsel %vm361, %v380, %v384
      %v420 = vunpack.c.l.b16 %v316
      %v421 = vunpack.c.h.b16 %v316
      %v422 = vunpack.c.l.b16 %v317
      %v423 = vunpack.c.h.b16 %v317
      %v424 = vunpack.c.l.b16 %v318
      %v425 = vunpack.c.h.b16 %v318
      %v426 = vunpack.c.l.b16 %v319
      %v427 = vunpack.c.h.b16 %v319
      %v428 = vunpack.c.l.b16 %v320
      %v429 = vunpack.c.h.b16 %v320
      %v430 = vunpack.c.l.b16 %v321
      %v431 = vunpack.c.h.b16 %v321
      %v432 = vunpack.c.l.b16 %v322
      %v433 = vunpack.c.h.b16 %v322
      %v434 = vunpack.c.l.b16 %v323
      %v435 = vunpack.c.h.b16 %v323
      %v436 = vunpack.c.l.b16 %v324
      %v437 = vunpack.c.h.b16 %v324
      %v438 = vunpack.c.l.b16 %v325
      %v439 = vunpack.c.h.b16 %v325
      %v440 = vunpack.c.l.b16 %v326
      %v441 = vunpack.c.h.b16 %v326
      %v442 = vunpack.c.l.b16 %v327
      %v443 = vunpack.c.h.b16 %v327
      %v444 = vunpack.c.l.b16 %v328
      %v445 = vunpack.c.h.b16 %v328
      %v446 = vunpack.c.l.b16 %v329
      %v447 = vunpack.c.h.b16 %v329
      %v448 = vunpack.c.l.b16 %v330
      %v449 = vunpack.c.h.b16 %v330
      %v450 = vunpack.c.l.b16 %v331
      %v451 = vunpack.c.h.b16 %v331
      %v452 = vunpack.c.l.b16 %v332
      %v453 = vunpack.c.h.b16 %v332
      %v454 = vunpack.c.l.b16 %v333
      %v455 = vunpack.c.h.b16 %v333
      %v456 = vunpack.c.l.b16 %v334
      %v457 = vunpack.c.h.b16 %v334
      %v458 = vunpack.c.l.b16 %v335
      %v459 = vunpack.c.h.b16 %v335
      %v460 = vunpack.c.l.b16 %v336
      %v461 = vunpack.c.h.b16 %v336
      %v462 = vunpack.c.l.b16 %v337
      %v463 = vunpack.c.h.b16 %v337
      %v464 = vunpack.c.l.b16 %v338
      %v465 = vunpack.c.h.b16 %v338
      %v466 = vunpack.c.l.b16 %v339
      %v467 = vunpack.c.h.b16 %v339
      %v468 = vunpack.c.l.b16 %v340
      %v469 = vunpack.c.h.b16 %v340
      %v470 = vunpack.c.l.b16 %v341
      %v471 = vunpack.c.h.b16 %v341
      %v472 = vunpack.c.l.b16 %v342
      %v473 = vunpack.c.h.b16 %v342
      %v474 = vunpack.c.l.b16 %v343
      %v475 = vunpack.c.h.b16 %v343
      %v476 = vunpack.c.l.b16 %v344
      %v477 = vunpack.c.h.b16 %v344
      %v478 = vunpack.c.l.b16 %v345
      %v479 = vunpack.c.h.b16 %v345
      %v480 = vunpack.c.l.b16 %v346
      %v481 = vunpack.c.h.b16 %v346
      %v482 = vunpack.c.l.b16 %v347
      %v483 = vunpack.c.h.b16 %v347
      %v484 = vpack.c.b16 %v422, %v420
      %v485 = vpack.c.b16 %v423, %v421
      %v486 = vpack.c.b16 %v426, %v424
      %v487 = vpack.c.b16 %v427, %v425
      %v488 = vpack.c.b16 %v430, %v428
      %v489 = vpack.c.b16 %v431, %v429
      %v490 = vpack.c.b16 %v434, %v432
      %v491 = vpack.c.b16 %v435, %v433
      %v492 = vpack.c.b16 %v438, %v436
      %v493 = vpack.c.b16 %v439, %v437
      %v494 = vpack.c.b16 %v442, %v440
      %v495 = vpack.c.b16 %v443, %v441
      %v496 = vpack.c.b16 %v446, %v444
      %v497 = vpack.c.b16 %v447, %v445
      %v498 = vpack.c.b16 %v450, %v448
      %v499 = vpack.c.b16 %v451, %v449
      %v500 = vpack.c.b16 %v454, %v452
      %v501 = vpack.c.b16 %v455, %v453
      %v502 = vpack.c.b16 %v458, %v456
      %v503 = vpack.c.b16 %v459, %v457
      %v504 = vpack.c.b16 %v462, %v460
      %v505 = vpack.c.b16 %v463, %v461
      %v506 = vpack.c.b16 %v466, %v464
      %v507 = vpack.c.b16 %v467, %v465
      %v508 = vpack.c.b16 %v470, %v468
      %v509 = vpack.c.b16 %v471, %v469
      %v510 = vpack.c.b16 %v474, %v472
      %v511 = vpack.c.b16 %v475, %v473
      %v512 = vpack.c.b16 %v478, %v476
      %v513 = vpack.c.b16 %v479, %v477
      %v514 = vpack.c.b16 %v482, %v480
      %v515 = vpack.c.b16 %v483, %v481
      %548 = vmatprep.subr.bf16.mxu0 %v485
      %549 = vmatpush1.bf16.msra.mxu0 %v484
      %550 = vmatprep.subr.bf16.mxu0 %v487
      %551 = vmatpush1.bf16.msra.mxu0 %v486
      %552 = vmatprep.subr.bf16.mxu0 %v489
      %553 = vmatpush1.bf16.msra.mxu0 %v488
      %554 = vmatprep.subr.bf16.mxu0 %v491
      %555 = vmatpush1.bf16.msra.mxu0 %v490
      %556 = vmatprep.subr.bf16.mxu0 %v493
      %557 = vmatpush1.bf16.msra.mxu0 %v492
      %558 = vmatprep.subr.bf16.mxu0 %v495
      %559 = vmatpush1.bf16.msra.mxu0 %v494
      %560 = vmatprep.subr.bf16.mxu0 %v497
      %561 = vmatpush1.bf16.msra.mxu0 %v496
      %562 = vmatprep.subr.bf16.mxu0 %v499
      %563 = vmatpush1.bf16.msra.mxu0 %v498
      %564 = vmatprep.subr.bf16.mxu0 %v501
      %565 = vmatpush1.bf16.msra.mxu0 %v500
      %566 = vmatprep.subr.bf16.mxu0 %v503
      %567 = vmatpush1.bf16.msra.mxu0 %v502
      %568 = vmatprep.subr.bf16.mxu0 %v505
      %569 = vmatpush1.bf16.msra.mxu0 %v504
      %570 = vmatprep.subr.bf16.mxu0 %v507
      %571 = vmatpush1.bf16.msra.mxu0 %v506
      %572 = vmatprep.subr.bf16.mxu0 %v509
      %573 = vmatpush1.bf16.msra.mxu0 %v508
      %574 = vmatprep.subr.bf16.mxu0 %v511
      %575 = vmatpush1.bf16.msra.mxu0 %v510
      %576 = vmatprep.subr.bf16.mxu0 %v513
      %577 = vmatpush1.bf16.msra.mxu0 %v512
      %578 = vmatprep.subr.bf16.mxu0 %v515
      %579 = vmatpush1.bf16.msra.mxu0 %v514
      %580 = vmatprep.mubr.bf16.mxu0 %v385
      %581 = vmatmul.mubr.bf16.gmra.mrb[0].mxu0 %v373
      %v582 = vpop.f32.mrb[0].mxu0
      %v583 = vadd.f32 0.0, %v582
      %v584 = vpop.f32.mrb[0].mxu0
      %v585 = vadd.f32 0.0, %v584
      %v586 = vpop.f32.mrb[0].mxu0
      %v587 = vadd.f32 0.0, %v586
      %v588 = vpop.f32.mrb[0].mxu0
      %v589 = vadd.f32 0.0, %v588
      %590 = vdwg.mxu0
      %v625 = vunpack.c.l.b16 %v283
      %v626 = vunpack.c.h.b16 %v283
      %v627 = vunpack.c.l.b16 %v284
      %v628 = vunpack.c.h.b16 %v284
      %v629 = vunpack.c.l.b16 %v285
      %v630 = vunpack.c.h.b16 %v285
      %v631 = vunpack.c.l.b16 %v286
      %v632 = vunpack.c.h.b16 %v286
      %v633 = vunpack.c.l.b16 %v287
      %v634 = vunpack.c.h.b16 %v287
      %v635 = vunpack.c.l.b16 %v288
      %v636 = vunpack.c.h.b16 %v288
      %v637 = vunpack.c.l.b16 %v289
      %v638 = vunpack.c.h.b16 %v289
      %v639 = vunpack.c.l.b16 %v290
      %v640 = vunpack.c.h.b16 %v290
      %v641 = vunpack.c.l.b16 %v291
      %v642 = vunpack.c.h.b16 %v291
      %v643 = vunpack.c.l.b16 %v292
      %v644 = vunpack.c.h.b16 %v292
      %v645 = vunpack.c.l.b16 %v293
      %v646 = vunpack.c.h.b16 %v293
      %v647 = vunpack.c.l.b16 %v294
      %v648 = vunpack.c.h.b16 %v294
      %v649 = vunpack.c.l.b16 %v295
      %v650 = vunpack.c.h.b16 %v295
      %v651 = vunpack.c.l.b16 %v296
      %v652 = vunpack.c.h.b16 %v296
      %v653 = vunpack.c.l.b16 %v297
      %v654 = vunpack.c.h.b16 %v297
      %v655 = vunpack.c.l.b16 %v298
      %v656 = vunpack.c.h.b16 %v298
      %v657 = vunpack.c.l.b16 %v299
      %v658 = vunpack.c.h.b16 %v299
      %v659 = vunpack.c.l.b16 %v300
      %v660 = vunpack.c.h.b16 %v300
      %v661 = vunpack.c.l.b16 %v301
      %v662 = vunpack.c.h.b16 %v301
      %v663 = vunpack.c.l.b16 %v302
      %v664 = vunpack.c.h.b16 %v302
      %v665 = vunpack.c.l.b16 %v303
      %v666 = vunpack.c.h.b16 %v303
      %v667 = vunpack.c.l.b16 %v304
      %v668 = vunpack.c.h.b16 %v304
      %v669 = vunpack.c.l.b16 %v305
      %v670 = vunpack.c.h.b16 %v305
      %v671 = vunpack.c.l.b16 %v306
      %v672 = vunpack.c.h.b16 %v306
      %v673 = vunpack.c.l.b16 %v307
      %v674 = vunpack.c.h.b16 %v307
      %v675 = vunpack.c.l.b16 %v308
      %v676 = vunpack.c.h.b16 %v308
      %v677 = vunpack.c.l.b16 %v309
      %v678 = vunpack.c.h.b16 %v309
      %v679 = vunpack.c.l.b16 %v310
      %v680 = vunpack.c.h.b16 %v310
      %v681 = vunpack.c.l.b16 %v311
      %v682 = vunpack.c.h.b16 %v311
      %v683 = vunpack.c.l.b16 %v312
      %v684 = vunpack.c.h.b16 %v312
      %v685 = vunpack.c.l.b16 %v313
      %v686 = vunpack.c.h.b16 %v313
      %v687 = vunpack.c.l.b16 %v314
      %v688 = vunpack.c.h.b16 %v314
      %v689 = vpack.c.b16 %v627, %v625
      %v690 = vpack.c.b16 %v628, %v626
      %v691 = vpack.c.b16 %v631, %v629
      %v692 = vpack.c.b16 %v632, %v630
      %v693 = vpack.c.b16 %v635, %v633
      %v694 = vpack.c.b16 %v636, %v634
      %v695 = vpack.c.b16 %v639, %v637
      %v696 = vpack.c.b16 %v640, %v638
      %v697 = vpack.c.b16 %v643, %v641
      %v698 = vpack.c.b16 %v644, %v642
      %v699 = vpack.c.b16 %v647, %v645
      %v700 = vpack.c.b16 %v648, %v646
      %v701 = vpack.c.b16 %v651, %v649
      %v702 = vpack.c.b16 %v652, %v650
      %v703 = vpack.c.b16 %v655, %v653
      %v704 = vpack.c.b16 %v656, %v654
      %v705 = vpack.c.b16 %v659, %v657
      %v706 = vpack.c.b16 %v660, %v658
      %v707 = vpack.c.b16 %v663, %v661
      %v708 = vpack.c.b16 %v664, %v662
      %v709 = vpack.c.b16 %v667, %v665
      %v710 = vpack.c.b16 %v668, %v666
      %v711 = vpack.c.b16 %v671, %v669
      %v712 = vpack.c.b16 %v672, %v670
      %v713 = vpack.c.b16 %v675, %v673
      %v714 = vpack.c.b16 %v676, %v674
      %v715 = vpack.c.b16 %v679, %v677
      %v716 = vpack.c.b16 %v680, %v678
      %v717 = vpack.c.b16 %v683, %v681
      %v718 = vpack.c.b16 %v684, %v682
      %v719 = vpack.c.b16 %v687, %v685
      %v720 = vpack.c.b16 %v688, %v686
      %753 = vmatprep.subr.bf16.mxu0 %v690
      %754 = vmatpush1.bf16.msra.mxu0 %v689
      %755 = vmatprep.subr.bf16.mxu0 %v692
      %756 = vmatpush1.bf16.msra.mxu0 %v691
      %757 = vmatprep.subr.bf16.mxu0 %v694
      %758 = vmatpush1.bf16.msra.mxu0 %v693
      %759 = vmatprep.subr.bf16.mxu0 %v696
      %760 = vmatpush1.bf16.msra.mxu0 %v695
      %761 = vmatprep.subr.bf16.mxu0 %v698
      %762 = vmatpush1.bf16.msra.mxu0 %v697
      %763 = vmatprep.subr.bf16.mxu0 %v700
      %764 = vmatpush1.bf16.msra.mxu0 %v699
      %765 = vmatprep.subr.bf16.mxu0 %v702
      %766 = vmatpush1.bf16.msra.mxu0 %v701
      %767 = vmatprep.subr.bf16.mxu0 %v704
      %768 = vmatpush1.bf16.msra.mxu0 %v703
      %769 = vmatprep.subr.bf16.mxu0 %v706
      %770 = vmatpush1.bf16.msra.mxu0 %v705
      %771 = vmatprep.subr.bf16.mxu0 %v708
      %772 = vmatpush1.bf16.msra.mxu0 %v707
      %773 = vmatprep.subr.bf16.mxu0 %v710
      %774 = vmatpush1.bf16.msra.mxu0 %v709
      %775 = vmatprep.subr.bf16.mxu0 %v712
      %776 = vmatpush1.bf16.msra.mxu0 %v711
      %777 = vmatprep.subr.bf16.mxu0 %v714
      %778 = vmatpush1.bf16.msra.mxu0 %v713
      %779 = vmatprep.subr.bf16.mxu0 %v716
      %780 = vmatpush1.bf16.msra.mxu0 %v715
      %781 = vmatprep.subr.bf16.mxu0 %v718
      %782 = vmatpush1.bf16.msra.mxu0 %v717
      %783 = vmatprep.subr.bf16.mxu0 %v720
      %784 = vmatpush1.bf16.msra.mxu0 %v719
      %785 = vmatprep.mubr.bf16.mxu0 %v358
      %786 = vmatmul.mubr.bf16.gmra.mrb[0].mxu0 %v357
      %v787 = vpop.f32.mrb[0].mxu0
      %v788 = vadd.f32 %v583, %v787
      %v789 = vpop.f32.mrb[0].mxu0
      %v790 = vadd.f32 %v585, %v789
      %v791 = vpop.f32.mrb[0].mxu0
      %v792 = vadd.f32 %v587, %v791
      %v793 = vpop.f32.mrb[0].mxu0
      %v794 = vadd.f32 %v589, %v793
      %795 = vdwg.mxu0
      %v796 = vld [vmem:[%s273] sm:$0xee]
      %s797 = scalar_lea.vmem %s1, 512
      %v798 = vld [vmem:[%s797] sm:$0xff]
      %v799 = vld [vmem:[%s797 + $0x8] sm:$0xff]
      %v800 = vld [vmem:[%s797 + $0x10] sm:$0xff]
      %v801 = vld [vmem:[%s797 + $0x18] sm:$0xff]
      %v802 = vld [vmem:[%s797 + $0x20] sm:$0xff]
      %v803 = vld [vmem:[%s797 + $0x28] sm:$0xff]
      %v804 = vld [vmem:[%s797 + $0x30] sm:$0xff]
      %v805 = vld [vmem:[%s797 + $0x38] sm:$0xff]
      %v806 = vld [vmem:[%s797 + $0x40] sm:$0xff]
      %v807 = vld [vmem:[%s797 + $0x48] sm:$0xff]
      %v808 = vld [vmem:[%s797 + $0x50] sm:$0xff]
      %v809 = vld [vmem:[%s797 + $0x58] sm:$0xff]
      %v810 = vld [vmem:[%s797 + $0x60] sm:$0xff]
      %v811 = vld [vmem:[%s797 + $0x68] sm:$0xff]
      %v812 = vld [vmem:[%s797 + $0x70] sm:$0xff]
      %v813 = vld [vmem:[%s797 + $0x78] sm:$0xff]
      %v814 = vld [vmem:[%s797 + $0x80] sm:$0xff]
      %v815 = vld [vmem:[%s797 + $0x88] sm:$0xff]
      %v816 = vld [vmem:[%s797 + $0x90] sm:$0xff]
      %v817 = vld [vmem:[%s797 + $0x98] sm:$0xff]
      %v818 = vld [vmem:[%s797 + $0xa0] sm:$0xff]
      %v819 = vld [vmem:[%s797 + $0xa8] sm:$0xff]
      %v820 = vld [vmem:[%s797 + $0xb0] sm:$0xff]
      %v821 = vld [vmem:[%s797 + $0xb8] sm:$0xff]
      %v822 = vld [vmem:[%s797 + $0xc0] sm:$0xff]
      %v823 = vld [vmem:[%s797 + $0xc8] sm:$0xff]
      %v824 = vld [vmem:[%s797 + $0xd0] sm:$0xff]
      %v825 = vld [vmem:[%s797 + $0xd8] sm:$0xff]
      %v826 = vld [vmem:[%s797 + $0xe0] sm:$0xff]
      %v827 = vld [vmem:[%s797 + $0xe8] sm:$0xff]
      %v828 = vld [vmem:[%s797 + $0xf0] sm:$0xff]
      %v829 = vld [vmem:[%s797 + $0xf8] sm:$0xff]
      %v831 = vunpack.c.l.b16 %v796
      %v832 = vunpack.c.h.b16 %v796
      %v833 = vpack.c.b16 %v353, %v831
      %v834 = vpack.c.b16 %v354, %v832
      %vm835 = vcmask 1046528
      %v836 = vrot.slane %v833, 1
      %v837 = vrot.slane %v359, 1
      %v838 = vsel %vm835, %v836, %v837
      %v839 = vrot.slane %v834, 1
      %v840 = vrot.slane %v360, 1
      %v841 = vsel %vm835, %v839, %v840
      %v876 = vunpack.c.l.b16 %v798
      %v877 = vunpack.c.h.b16 %v798
      %v878 = vunpack.c.l.b16 %v799
      %v879 = vunpack.c.h.b16 %v799
      %v880 = vunpack.c.l.b16 %v800
      %v881 = vunpack.c.h.b16 %v800
      %v882 = vunpack.c.l.b16 %v801
      %v883 = vunpack.c.h.b16 %v801
      %v884 = vunpack.c.l.b16 %v802
      %v885 = vunpack.c.h.b16 %v802
      %v886 = vunpack.c.l.b16 %v803
      %v887 = vunpack.c.h.b16 %v803
      %v888 = vunpack.c.l.b16 %v804
      %v889 = vunpack.c.h.b16 %v804
      %v890 = vunpack.c.l.b16 %v805
      %v891 = vunpack.c.h.b16 %v805
      %v892 = vunpack.c.l.b16 %v806
      %v893 = vunpack.c.h.b16 %v806
      %v894 = vunpack.c.l.b16 %v807
      %v895 = vunpack.c.h.b16 %v807
      %v896 = vunpack.c.l.b16 %v808
      %v897 = vunpack.c.h.b16 %v808
      %v898 = vunpack.c.l.b16 %v809
      %v899 = vunpack.c.h.b16 %v809
      %v900 = vunpack.c.l.b16 %v810
      %v901 = vunpack.c.h.b16 %v810
      %v902 = vunpack.c.l.b16 %v811
      %v903 = vunpack.c.h.b16 %v811
      %v904 = vunpack.c.l.b16 %v812
      %v905 = vunpack.c.h.b16 %v812
      %v906 = vunpack.c.l.b16 %v813
      %v907 = vunpack.c.h.b16 %v813
      %v908 = vunpack.c.l.b16 %v814
      %v909 = vunpack.c.h.b16 %v814
      %v910 = vunpack.c.l.b16 %v815
      %v911 = vunpack.c.h.b16 %v815
      %v912 = vunpack.c.l.b16 %v816
      %v913 = vunpack.c.h.b16 %v816
      %v914 = vunpack.c.l.b16 %v817
      %v915 = vunpack.c.h.b16 %v817
      %v916 = vunpack.c.l.b16 %v818
      %v917 = vunpack.c.h.b16 %v818
      %v918 = vunpack.c.l.b16 %v819
      %v919 = vunpack.c.h.b16 %v819
      %v920 = vunpack.c.l.b16 %v820
      %v921 = vunpack.c.h.b16 %v820
      %v922 = vunpack.c.l.b16 %v821
      %v923 = vunpack.c.h.b16 %v821
      %v924 = vunpack.c.l.b16 %v822
      %v925 = vunpack.c.h.b16 %v822
      %v926 = vunpack.c.l.b16 %v823
      %v927 = vunpack.c.h.b16 %v823
      %v928 = vunpack.c.l.b16 %v824
      %v929 = vunpack.c.h.b16 %v824
      %v930 = vunpack.c.l.b16 %v825
      %v931 = vunpack.c.h.b16 %v825
      %v932 = vunpack.c.l.b16 %v826
      %v933 = vunpack.c.h.b16 %v826
      %v934 = vunpack.c.l.b16 %v827
      %v935 = vunpack.c.h.b16 %v827
      %v936 = vunpack.c.l.b16 %v828
      %v937 = vunpack.c.h.b16 %v828
      %v938 = vunpack.c.l.b16 %v829
      %v939 = vunpack.c.h.b16 %v829
      %v940 = vpack.c.b16 %v878, %v876
      %v941 = vpack.c.b16 %v879, %v877
      %v942 = vpack.c.b16 %v882, %v880
      %v943 = vpack.c.b16 %v883, %v881
      %v944 = vpack.c.b16 %v886, %v884
      %v945 = vpack.c.b16 %v887, %v885
      %v946 = vpack.c.b16 %v890, %v888
      %v947 = vpack.c.b16 %v891, %v889
      %v948 = vpack.c.b16 %v894, %v892
      %v949 = vpack.c.b16 %v895, %v893
      %v950 = vpack.c.b16 %v898, %v896
      %v951 = vpack.c.b16 %v899, %v897
      %v952 = vpack.c.b16 %v902, %v900
      %v953 = vpack.c.b16 %v903, %v901
      %v954 = vpack.c.b16 %v906, %v904
      %v955 = vpack.c.b16 %v907, %v905
      %v956 = vpack.c.b16 %v910, %v908
      %v957 = vpack.c.b16 %v911, %v909
      %v958 = vpack.c.b16 %v914, %v912
      %v959 = vpack.c.b16 %v915, %v913
      %v960 = vpack.c.b16 %v918, %v916
      %v961 = vpack.c.b16 %v919, %v917
      %v962 = vpack.c.b16 %v922, %v920
      %v963 = vpack.c.b16 %v923, %v921
      %v964 = vpack.c.b16 %v926, %v924
      %v965 = vpack.c.b16 %v927, %v925
      %v966 = vpack.c.b16 %v930, %v928
      %v967 = vpack.c.b16 %v931, %v929
      %v968 = vpack.c.b16 %v934, %v932
      %v969 = vpack.c.b16 %v935, %v933
      %v970 = vpack.c.b16 %v938, %v936
      %v971 = vpack.c.b16 %v939, %v937
      %1004 = vmatprep.subr.bf16.mxu0 %v941
      %1005 = vmatpush1.bf16.msra.mxu0 %v940
      %1006 = vmatprep.subr.bf16.mxu0 %v943
      %1007 = vmatpush1.bf16.msra.mxu0 %v942
      %1008 = vmatprep.subr.bf16.mxu0 %v945
      %1009 = vmatpush1.bf16.msra.mxu0 %v944
      %1010 = vmatprep.subr.bf16.mxu0 %v947
      %1011 = vmatpush1.bf16.msra.mxu0 %v946
      %1012 = vmatprep.subr.bf16.mxu0 %v949
      %1013 = vmatpush1.bf16.msra.mxu0 %v948
      %1014 = vmatprep.subr.bf16.mxu0 %v951
      %1015 = vmatpush1.bf16.msra.mxu0 %v950
      %1016 = vmatprep.subr.bf16.mxu0 %v953
      %1017 = vmatpush1.bf16.msra.mxu0 %v952
      %1018 = vmatprep.subr.bf16.mxu0 %v955
      %1019 = vmatpush1.bf16.msra.mxu0 %v954
      %1020 = vmatprep.subr.bf16.mxu0 %v957
      %1021 = vmatpush1.bf16.msra.mxu0 %v956
      %1022 = vmatprep.subr.bf16.mxu0 %v959
      %1023 = vmatpush1.bf16.msra.mxu0 %v958
      %1024 = vmatprep.subr.bf16.mxu0 %v961
      %1025 = vmatpush1.bf16.msra.mxu0 %v960
      %1026 = vmatprep.subr.bf16.mxu0 %v963
      %1027 = vmatpush1.bf16.msra.mxu0 %v962
      %1028 = vmatprep.subr.bf16.mxu0 %v965
      %1029 = vmatpush1.bf16.msra.mxu0 %v964
      %1030 = vmatprep.subr.bf16.mxu0 %v967
      %1031 = vmatpush1.bf16.msra.mxu0 %v966
      %1032 = vmatprep.subr.bf16.mxu0 %v969
      %1033 = vmatpush1.bf16.msra.mxu0 %v968
      %1034 = vmatprep.subr.bf16.mxu0 %v971
      %1035 = vmatpush1.bf16.msra.mxu0 %v970
      %1036 = vmatprep.mubr.bf16.mxu0 %v841
      %1037 = vmatmul.mubr.bf16.gmra.mrb[0].mxu0 %v838
      %v1038 = vpop.f32.mrb[0].mxu0
      %v1039 = vadd.f32 0.0, %v1038
      %v1040 = vpop.f32.mrb[0].mxu0
      %v1041 = vadd.f32 0.0, %v1040
      %v1042 = vpop.f32.mrb[0].mxu0
      %v1043 = vadd.f32 0.0, %v1042
      %v1044 = vpop.f32.mrb[0].mxu0
      %v1045 = vadd.f32 0.0, %v1044
      %1046 = vdwg.mxu0
      %v1047 = vadd.f32 %v788, %v1039
      %v1048 = vadd.f32 %v790, %v1041
      %v1049 = vadd.f32 %v792, %v1043
      %v1050 = vadd.f32 %v794, %v1045
      %v1051 = vld [vmem:[%s2] sm:$0x3]
      %v1053 = vlaneseq
      %v1054 = vshrl.u32 %v1053, 7
      %v1055 = vsub.s32 0, %v1054
      %v1056 = vrot.slane %v1051, %v1055
      %v1057 = vlaneseq
      %v1058 = vshrl.u32 %v1057, 7
      %v1059 = vsub.s32 1, %v1058
      %v1060 = vrot.slane %v1051, %v1059
      %v1063 = vmul.f32 %v1047, %v1056
      %v1064 = vmul.f32 %v1048, %v1060
      %v1065 = vmul.f32 %v1049, %v1056
      %v1066 = vmul.f32 %v1050, %v1060
      %v1067 = vld [vmem:[%s3] sm:$0x3]
      %v1069 = vlaneseq
      %v1070 = vshrl.u32 %v1069, 7
      %v1071 = vsub.s32 0, %v1070
      %v1072 = vrot.slane %v1067, %v1071
      %v1073 = vlaneseq
      %v1074 = vshrl.u32 %v1073, 7
      %v1075 = vsub.s32 1, %v1074
      %v1076 = vrot.slane %v1067, %v1075
      %v1079 = vadd.f32 %v1063, %v1072
      %v1080 = vadd.f32 %v1064, %v1076
      %v1081 = vadd.f32 %v1065, %v1072
      %v1082 = vadd.f32 %v1066, %v1076
      %v1083 = vmax.f32 %v1079, 0.0
      %v1084 = vmax.f32 %v1080, 0.0
      %v1085 = vmax.f32 %v1081, 0.0
      %v1086 = vmax.f32 %v1082, 0.0
      %v1087 = vpack.c.bf16 %v1085, %v1083
      %v1088 = vpack.c.bf16 %v1086, %v1084
      %vm1089 = vcmask 1043459
      %vm1090 = vsmask.f32 7950
      %vm1091 = vmand %vm1089, %vm1090
      %vm1092 = vcmask 1047559
      %vm1093 = vsmask.f32 7966
      %vm1094 = vmand %vm1092, %vm1093
      %vm1095 = vmor %vm1094, %vm1091
      %v1096 = vld [vmem:[#allocation2 + $0x8] sm:$0x88]
      %v1097 = vsel %vm1095, 0, %v1096
      %1098 = vst [vmem:[#allocation2 + $0x8] sm:$0x88] %v1097
      %vm1099 = vcmask 1040384
      %vm1100 = vsmask.f32 256
      %vm1101 = vmand %vm1099, %vm1100
      %vm1102 = vcmask 1044484
      %vm1103 = vsmask.f32 4352
      %vm1104 = vmand %vm1102, %vm1103
      %vm1105 = vmor %vm1104, %vm1101
      %v1106 = vld [vmem:[#allocation2 + $0x20] sm:$0x11]
      %v1107 = vsel %vm1105, 0, %v1106
      %1108 = vst [vmem:[#allocation2 + $0x20] sm:$0x11] %v1107
      %v1111 = vunpack.c.l.b16 %v1087
      %v1112 = vunpack.c.l.b16 %v1088
      %v1113 = vunpack.c.h.b16 %v1087
      %v1114 = vunpack.c.h.b16 %v1088
      %v1115 = vpack.c.b16 %v1112, %v1111
      %v1116 = vpack.c.b16 %v1114, %v1113
      %1119 = vst [vmem:[#allocation2 + $0x10] sm:$0xff] %v1115
      %1120 = vst [vmem:[#allocation2 + $0x18] sm:$0xff] %v1116
      %v1121 = vld [vmem:[#allocation2 + $0x8] sm:$0x88]
      %v1122 = vld [vmem:[#allocation2 + $0x10] sm:$0xff]
      %v1123 = vld [vmem:[#allocation2 + $0x18] sm:$0xff]
      %v1124 = vld [vmem:[%s4] sm:$0xff]
      %v1125 = vld [vmem:[%s4 + $0x8] sm:$0xff]
      %v1126 = vld [vmem:[%s4 + $0x10] sm:$0xff]
      %v1127 = vld [vmem:[%s4 + $0x18] sm:$0xff]
      %v1128 = vld [vmem:[%s4 + $0x20] sm:$0xff]
      %v1129 = vld [vmem:[%s4 + $0x28] sm:$0xff]
      %v1130 = vld [vmem:[%s4 + $0x30] sm:$0xff]
      %v1131 = vld [vmem:[%s4 + $0x38] sm:$0xff]
      %v1132 = vld [vmem:[%s4 + $0x40] sm:$0xff]
      %v1133 = vld [vmem:[%s4 + $0x48] sm:$0xff]
      %v1134 = vld [vmem:[%s4 + $0x50] sm:$0xff]
      %v1135 = vld [vmem:[%s4 + $0x58] sm:$0xff]
      %v1136 = vld [vmem:[%s4 + $0x60] sm:$0xff]
      %v1137 = vld [vmem:[%s4 + $0x68] sm:$0xff]
      %v1138 = vld [vmem:[%s4 + $0x70] sm:$0xff]
      %v1139 = vld [vmem:[%s4 + $0x78] sm:$0xff]
      %v1140 = vld [vmem:[%s4 + $0x80] sm:$0xff]
      %v1141 = vld [vmem:[%s4 + $0x88] sm:$0xff]
      %v1142 = vld [vmem:[%s4 + $0x90] sm:$0xff]
      %v1143 = vld [vmem:[%s4 + $0x98] sm:$0xff]
      %v1144 = vld [vmem:[%s4 + $0xa0] sm:$0xff]
      %v1145 = vld [vmem:[%s4 + $0xa8] sm:$0xff]
      %v1146 = vld [vmem:[%s4 + $0xb0] sm:$0xff]
      %v1147 = vld [vmem:[%s4 + $0xb8] sm:$0xff]
      %v1148 = vld [vmem:[%s4 + $0xc0] sm:$0xff]
      %v1149 = vld [vmem:[%s4 + $0xc8] sm:$0xff]
      %v1150 = vld [vmem:[%s4 + $0xd0] sm:$0xff]
      %v1151 = vld [vmem:[%s4 + $0xd8] sm:$0xff]
      %v1152 = vld [vmem:[%s4 + $0xe0] sm:$0xff]
      %v1153 = vld [vmem:[%s4 + $0xe8] sm:$0xff]
      %v1154 = vld [vmem:[%s4 + $0xf0] sm:$0xff]
      %v1155 = vld [vmem:[%s4 + $0xf8] sm:$0xff]
      %s1156 = scalar_lea.vmem %s4, 256
      %v1157 = vld [vmem:[%s1156] sm:$0xff]
      %v1158 = vld [vmem:[%s1156 + $0x8] sm:$0xff]
      %v1159 = vld [vmem:[%s1156 + $0x10] sm:$0xff]
      %v1160 = vld [vmem:[%s1156 + $0x18] sm:$0xff]
      %v1161 = vld [vmem:[%s1156 + $0x20] sm:$0xff]
      %v1162 = vld [vmem:[%s1156 + $0x28] sm:$0xff]
      %v1163 = vld [vmem:[%s1156 + $0x30] sm:$0xff]
      %v1164 = vld [vmem:[%s1156 + $0x38] sm:$0xff]
      %v1165 = vld [vmem:[%s1156 + $0x40] sm:$0xff]
      %v1166 = vld [vmem:[%s1156 + $0x48] sm:$0xff]
      %v1167 = vld [vmem:[%s1156 + $0x50] sm:$0xff]
      %v1168 = vld [vmem:[%s1156 + $0x58] sm:$0xff]
      %v1169 = vld [vmem:[%s1156 + $0x60] sm:$0xff]
      %v1170 = vld [vmem:[%s1156 + $0x68] sm:$0xff]
      %v1171 = vld [vmem:[%s1156 + $0x70] sm:$0xff]
      %v1172 = vld [vmem:[%s1156 + $0x78] sm:$0xff]
      %v1173 = vld [vmem:[%s1156 + $0x80] sm:$0xff]
      %v1174 = vld [vmem:[%s1156 + $0x88] sm:$0xff]
      %v1175 = vld [vmem:[%s1156 + $0x90] sm:$0xff]
      %v1176 = vld [vmem:[%s1156 + $0x98] sm:$0xff]
      %v1177 = vld [vmem:[%s1156 + $0xa0] sm:$0xff]
      %v1178 = vld [vmem:[%s1156 + $0xa8] sm:$0xff]
      %v1179 = vld [vmem:[%s1156 + $0xb0] sm:$0xff]
      %v1180 = vld [vmem:[%s1156 + $0xb8] sm:$0xff]
      %v1181 = vld [vmem:[%s1156 + $0xc0] sm:$0xff]
      %v1182 = vld [vmem:[%s1156 + $0xc8] sm:$0xff]
      %v1183 = vld [vmem:[%s1156 + $0xd0] sm:$0xff]
      %v1184 = vld [vmem:[%s1156 + $0xd8] sm:$0xff]
      %v1185 = vld [vmem:[%s1156 + $0xe0] sm:$0xff]
      %v1186 = vld [vmem:[%s1156 + $0xe8] sm:$0xff]
      %v1187 = vld [vmem:[%s1156 + $0xf0] sm:$0xff]
      %v1188 = vld [vmem:[%s1156 + $0xf8] sm:$0xff]
      %v1221 = vunpack.c.l.b16 %v1157
      %v1222 = vunpack.c.h.b16 %v1157
      %v1223 = vunpack.c.l.b16 %v1158
      %v1224 = vunpack.c.h.b16 %v1158
      %v1225 = vunpack.c.l.b16 %v1159
      %v1226 = vunpack.c.h.b16 %v1159
      %v1227 = vunpack.c.l.b16 %v1160
      %v1228 = vunpack.c.h.b16 %v1160
      %v1229 = vunpack.c.l.b16 %v1161
      %v1230 = vunpack.c.h.b16 %v1161
      %v1231 = vunpack.c.l.b16 %v1162
      %v1232 = vunpack.c.h.b16 %v1162
      %v1233 = vunpack.c.l.b16 %v1163
      %v1234 = vunpack.c.h.b16 %v1163
      %v1235 = vunpack.c.l.b16 %v1164
      %v1236 = vunpack.c.h.b16 %v1164
      %v1237 = vunpack.c.l.b16 %v1165
      %v1238 = vunpack.c.h.b16 %v1165
      %v1239 = vunpack.c.l.b16 %v1166
      %v1240 = vunpack.c.h.b16 %v1166
      %v1241 = vunpack.c.l.b16 %v1167
      %v1242 = vunpack.c.h.b16 %v1167
      %v1243 = vunpack.c.l.b16 %v1168
      %v1244 = vunpack.c.h.b16 %v1168
      %v1245 = vunpack.c.l.b16 %v1169
      %v1246 = vunpack.c.h.b16 %v1169
      %v1247 = vunpack.c.l.b16 %v1170
      %v1248 = vunpack.c.h.b16 %v1170
      %v1249 = vunpack.c.l.b16 %v1171
      %v1250 = vunpack.c.h.b16 %v1171
      %v1251 = vunpack.c.l.b16 %v1172
      %v1252 = vunpack.c.h.b16 %v1172
      %v1253 = vunpack.c.l.b16 %v1173
      %v1254 = vunpack.c.h.b16 %v1173
      %v1255 = vunpack.c.l.b16 %v1174
      %v1256 = vunpack.c.h.b16 %v1174
      %v1257 = vunpack.c.l.b16 %v1175
      %v1258 = vunpack.c.h.b16 %v1175
      %v1259 = vunpack.c.l.b16 %v1176
      %v1260 = vunpack.c.h.b16 %v1176
      %v1261 = vunpack.c.l.b16 %v1177
      %v1262 = vunpack.c.h.b16 %v1177
      %v1263 = vunpack.c.l.b16 %v1178
      %v1264 = vunpack.c.h.b16 %v1178
      %v1265 = vunpack.c.l.b16 %v1179
      %v1266 = vunpack.c.h.b16 %v1179
      %v1267 = vunpack.c.l.b16 %v1180
      %v1268 = vunpack.c.h.b16 %v1180
      %v1269 = vunpack.c.l.b16 %v1181
      %v1270 = vunpack.c.h.b16 %v1181
      %v1271 = vunpack.c.l.b16 %v1182
      %v1272 = vunpack.c.h.b16 %v1182
      %v1273 = vunpack.c.l.b16 %v1183
      %v1274 = vunpack.c.h.b16 %v1183
      %v1275 = vunpack.c.l.b16 %v1184
      %v1276 = vunpack.c.h.b16 %v1184
      %v1277 = vunpack.c.l.b16 %v1185
      %v1278 = vunpack.c.h.b16 %v1185
      %v1279 = vunpack.c.l.b16 %v1186
      %v1280 = vunpack.c.h.b16 %v1186
      %v1281 = vunpack.c.l.b16 %v1187
      %v1282 = vunpack.c.h.b16 %v1187
      %v1283 = vunpack.c.l.b16 %v1188
      %v1284 = vunpack.c.h.b16 %v1188
      %v1285 = vpack.c.b16 %v1223, %v1221
      %v1286 = vpack.c.b16 %v1224, %v1222
      %v1287 = vpack.c.b16 %v1227, %v1225
      %v1288 = vpack.c.b16 %v1228, %v1226
      %v1289 = vpack.c.b16 %v1231, %v1229
      %v1290 = vpack.c.b16 %v1232, %v1230
      %v1291 = vpack.c.b16 %v1235, %v1233
      %v1292 = vpack.c.b16 %v1236, %v1234
      %v1293 = vpack.c.b16 %v1239, %v1237
      %v1294 = vpack.c.b16 %v1240, %v1238
      %v1295 = vpack.c.b16 %v1243, %v1241
      %v1296 = vpack.c.b16 %v1244, %v1242
      %v1297 = vpack.c.b16 %v1247, %v1245
      %v1298 = vpack.c.b16 %v1248, %v1246
      %v1299 = vpack.c.b16 %v1251, %v1249
      %v1300 = vpack.c.b16 %v1252, %v1250
      %v1301 = vpack.c.b16 %v1255, %v1253
      %v1302 = vpack.c.b16 %v1256, %v1254
      %v1303 = vpack.c.b16 %v1259, %v1257
      %v1304 = vpack.c.b16 %v1260, %v1258
      %v1305 = vpack.c.b16 %v1263, %v1261
      %v1306 = vpack.c.b16 %v1264, %v1262
      %v1307 = vpack.c.b16 %v1267, %v1265
      %v1308 = vpack.c.b16 %v1268, %v1266
      %v1309 = vpack.c.b16 %v1271, %v1269
      %v1310 = vpack.c.b16 %v1272, %v1270
      %v1311 = vpack.c.b16 %v1275, %v1273
      %v1312 = vpack.c.b16 %v1276, %v1274
      %v1313 = vpack.c.b16 %v1279, %v1277
      %v1314 = vpack.c.b16 %v1280, %v1278
      %v1315 = vpack.c.b16 %v1283, %v1281
      %v1316 = vpack.c.b16 %v1284, %v1282
      %1349 = vmatprep.subr.bf16.mxu0 %v1286
      %1350 = vmatpush1.bf16.msra.mxu0 %v1285
      %1351 = vmatprep.subr.bf16.mxu0 %v1288
      %1352 = vmatpush1.bf16.msra.mxu0 %v1287
      %1353 = vmatprep.subr.bf16.mxu0 %v1290
      %1354 = vmatpush1.bf16.msra.mxu0 %v1289
      %1355 = vmatprep.subr.bf16.mxu0 %v1292
      %1356 = vmatpush1.bf16.msra.mxu0 %v1291
      %1357 = vmatprep.subr.bf16.mxu0 %v1294
      %1358 = vmatpush1.bf16.msra.mxu0 %v1293
      %1359 = vmatprep.subr.bf16.mxu0 %v1296
      %1360 = vmatpush1.bf16.msra.mxu0 %v1295
      %1361 = vmatprep.subr.bf16.mxu0 %v1298
      %1362 = vmatpush1.bf16.msra.mxu0 %v1297
      %1363 = vmatprep.subr.bf16.mxu0 %v1300
      %1364 = vmatpush1.bf16.msra.mxu0 %v1299
      %1365 = vmatprep.subr.bf16.mxu0 %v1302
      %1366 = vmatpush1.bf16.msra.mxu0 %v1301
      %1367 = vmatprep.subr.bf16.mxu0 %v1304
      %1368 = vmatpush1.bf16.msra.mxu0 %v1303
      %1369 = vmatprep.subr.bf16.mxu0 %v1306
      %1370 = vmatpush1.bf16.msra.mxu0 %v1305
      %1371 = vmatprep.subr.bf16.mxu0 %v1308
      %1372 = vmatpush1.bf16.msra.mxu0 %v1307
      %1373 = vmatprep.subr.bf16.mxu0 %v1310
      %1374 = vmatpush1.bf16.msra.mxu0 %v1309
      %1375 = vmatprep.subr.bf16.mxu0 %v1312
      %1376 = vmatpush1.bf16.msra.mxu0 %v1311
      %1377 = vmatprep.subr.bf16.mxu0 %v1314
      %1378 = vmatpush1.bf16.msra.mxu0 %v1313
      %1379 = vmatprep.subr.bf16.mxu0 %v1316
      %1380 = vmatpush1.bf16.msra.mxu0 %v1315
      %1381 = vmatprep.mubr.bf16.mxu0 %v1088
      %1382 = vmatmul.mubr.bf16.gmra.mrb[0].mxu0 %v1087
      %v1383 = vpop.f32.mrb[0].mxu0
      %v1384 = vadd.f32 0.0, %v1383
      %v1385 = vpop.f32.mrb[0].mxu0
      %v1386 = vadd.f32 0.0, %v1385
      %v1387 = vpop.f32.mrb[0].mxu0
      %v1388 = vadd.f32 0.0, %v1387
      %v1389 = vpop.f32.mrb[0].mxu0
      %v1390 = vadd.f32 0.0, %v1389
      %1391 = vdwg.mxu0
      %v1395 = vunpack.c.l.b16 %v1121
      %v1396 = vunpack.c.h.b16 %v1121
      %v1397 = vunpack.c.l.b16 %v1122
      %v1398 = vunpack.c.h.b16 %v1122
      %v1399 = vunpack.c.l.b16 %v1123
      %v1400 = vunpack.c.h.b16 %v1123
      %v1401 = vpack.c.b16 %v1397, %v1395
      %v1402 = vpack.c.b16 %v1398, %v1396
      %v1403 = vpack.c.b16 %v1399, %v1399
      %v1404 = vpack.c.b16 %v1400, %v1400
      %v1406 = vshrl.u32 %v1401, 16
      %v1408 = vrot.slane %v1406, 3
      %v1409 = vshll.u32 %v1401, 16
      %v1411 = vrot.slane %v1409, 4
      %v1412 = vor.u32 %v1408, %v1411
      %v1414 = vshrl.u32 %v1403, 16
      %v1416 = vrot.slane %v1414, 3
      %v1417 = vshll.u32 %v1403, 16
      %v1419 = vrot.slane %v1417, 4
      %v1420 = vor.u32 %v1416, %v1419
      %v1421 = vsel %vm1103, %v1412, %v1420
      %v1423 = vshrl.u32 %v1402, 16
      %v1425 = vrot.slane %v1423, 3
      %v1426 = vshll.u32 %v1402, 16
      %v1428 = vrot.slane %v1426, 4
      %v1429 = vor.u32 %v1425, %v1428
      %v1431 = vshrl.u32 %v1404, 16
      %v1433 = vrot.slane %v1431, 3
      %v1434 = vshll.u32 %v1404, 16
      %v1436 = vrot.slane %v1434, 4
      %v1437 = vor.u32 %v1433, %v1436
      %v1438 = vsel %vm1103, %v1429, %v1437
      %v1473 = vunpack.c.l.b16 %v1124
      %v1474 = vunpack.c.h.b16 %v1124
      %v1475 = vunpack.c.l.b16 %v1125
      %v1476 = vunpack.c.h.b16 %v1125
      %v1477 = vunpack.c.l.b16 %v1126
      %v1478 = vunpack.c.h.b16 %v1126
      %v1479 = vunpack.c.l.b16 %v1127
      %v1480 = vunpack.c.h.b16 %v1127
      %v1481 = vunpack.c.l.b16 %v1128
      %v1482 = vunpack.c.h.b16 %v1128
      %v1483 = vunpack.c.l.b16 %v1129
      %v1484 = vunpack.c.h.b16 %v1129
      %v1485 = vunpack.c.l.b16 %v1130
      %v1486 = vunpack.c.h.b16 %v1130
      %v1487 = vunpack.c.l.b16 %v1131
      %v1488 = vunpack.c.h.b16 %v1131
      %v1489 = vunpack.c.l.b16 %v1132
      %v1490 = vunpack.c.h.b16 %v1132
      %v1491 = vunpack.c.l.b16 %v1133
      %v1492 = vunpack.c.h.b16 %v1133
      %v1493 = vunpack.c.l.b16 %v1134
      %v1494 = vunpack.c.h.b16 %v1134
      %v1495 = vunpack.c.l.b16 %v1135
      %v1496 = vunpack.c.h.b16 %v1135
      %v1497 = vunpack.c.l.b16 %v1136
      %v1498 = vunpack.c.h.b16 %v1136
      %v1499 = vunpack.c.l.b16 %v1137
      %v1500 = vunpack.c.h.b16 %v1137
      %v1501 = vunpack.c.l.b16 %v1138
      %v1502 = vunpack.c.h.b16 %v1138
      %v1503 = vunpack.c.l.b16 %v1139
      %v1504 = vunpack.c.h.b16 %v1139
      %v1505 = vunpack.c.l.b16 %v1140
      %v1506 = vunpack.c.h.b16 %v1140
      %v1507 = vunpack.c.l.b16 %v1141
      %v1508 = vunpack.c.h.b16 %v1141
      %v1509 = vunpack.c.l.b16 %v1142
      %v1510 = vunpack.c.h.b16 %v1142
      %v1511 = vunpack.c.l.b16 %v1143
      %v1512 = vunpack.c.h.b16 %v1143
      %v1513 = vunpack.c.l.b16 %v1144
      %v1514 = vunpack.c.h.b16 %v1144
      %v1515 = vunpack.c.l.b16 %v1145
      %v1516 = vunpack.c.h.b16 %v1145
      %v1517 = vunpack.c.l.b16 %v1146
      %v1518 = vunpack.c.h.b16 %v1146
      %v1519 = vunpack.c.l.b16 %v1147
      %v1520 = vunpack.c.h.b16 %v1147
      %v1521 = vunpack.c.l.b16 %v1148
      %v1522 = vunpack.c.h.b16 %v1148
      %v1523 = vunpack.c.l.b16 %v1149
      %v1524 = vunpack.c.h.b16 %v1149
      %v1525 = vunpack.c.l.b16 %v1150
      %v1526 = vunpack.c.h.b16 %v1150
      %v1527 = vunpack.c.l.b16 %v1151
      %v1528 = vunpack.c.h.b16 %v1151
      %v1529 = vunpack.c.l.b16 %v1152
      %v1530 = vunpack.c.h.b16 %v1152
      %v1531 = vunpack.c.l.b16 %v1153
      %v1532 = vunpack.c.h.b16 %v1153
      %v1533 = vunpack.c.l.b16 %v1154
      %v1534 = vunpack.c.h.b16 %v1154
      %v1535 = vunpack.c.l.b16 %v1155
      %v1536 = vunpack.c.h.b16 %v1155
      %v1537 = vpack.c.b16 %v1475, %v1473
      %v1538 = vpack.c.b16 %v1476, %v1474
      %v1539 = vpack.c.b16 %v1479, %v1477
      %v1540 = vpack.c.b16 %v1480, %v1478
      %v1541 = vpack.c.b16 %v1483, %v1481
      %v1542 = vpack.c.b16 %v1484, %v1482
      %v1543 = vpack.c.b16 %v1487, %v1485
      %v1544 = vpack.c.b16 %v1488, %v1486
      %v1545 = vpack.c.b16 %v1491, %v1489
      %v1546 = vpack.c.b16 %v1492, %v1490
      %v1547 = vpack.c.b16 %v1495, %v1493
      %v1548 = vpack.c.b16 %v1496, %v1494
      %v1549 = vpack.c.b16 %v1499, %v1497
      %v1550 = vpack.c.b16 %v1500, %v1498
      %v1551 = vpack.c.b16 %v1503, %v1501
      %v1552 = vpack.c.b16 %v1504, %v1502
      %v1553 = vpack.c.b16 %v1507, %v1505
      %v1554 = vpack.c.b16 %v1508, %v1506
      %v1555 = vpack.c.b16 %v1511, %v1509
      %v1556 = vpack.c.b16 %v1512, %v1510
      %v1557 = vpack.c.b16 %v1515, %v1513
      %v1558 = vpack.c.b16 %v1516, %v1514
      %v1559 = vpack.c.b16 %v1519, %v1517
      %v1560 = vpack.c.b16 %v1520, %v1518
      %v1561 = vpack.c.b16 %v1523, %v1521
      %v1562 = vpack.c.b16 %v1524, %v1522
      %v1563 = vpack.c.b16 %v1527, %v1525
      %v1564 = vpack.c.b16 %v1528, %v1526
      %v1565 = vpack.c.b16 %v1531, %v1529
      %v1566 = vpack.c.b16 %v1532, %v1530
      %v1567 = vpack.c.b16 %v1535, %v1533
      %v1568 = vpack.c.b16 %v1536, %v1534
      %1601 = vmatprep.subr.bf16.mxu0 %v1538
      %1602 = vmatpush1.bf16.msra.mxu0 %v1537
      %1603 = vmatprep.subr.bf16.mxu0 %v1540
      %1604 = vmatpush1.bf16.msra.mxu0 %v1539
      %1605 = vmatprep.subr.bf16.mxu0 %v1542
      %1606 = vmatpush1.bf16.msra.mxu0 %v1541
      %1607 = vmatprep.subr.bf16.mxu0 %v1544
      %1608 = vmatpush1.bf16.msra.mxu0 %v1543
      %1609 = vmatprep.subr.bf16.mxu0 %v1546
      %1610 = vmatpush1.bf16.msra.mxu0 %v1545
      %1611 = vmatprep.subr.bf16.mxu0 %v1548
      %1612 = vmatpush1.bf16.msra.mxu0 %v1547
      %1613 = vmatprep.subr.bf16.mxu0 %v1550
      %1614 = vmatpush1.bf16.msra.mxu0 %v1549
      %1615 = vmatprep.subr.bf16.mxu0 %v1552
      %1616 = vmatpush1.bf16.msra.mxu0 %v1551
      %1617 = vmatprep.subr.bf16.mxu0 %v1554
      %1618 = vmatpush1.bf16.msra.mxu0 %v1553
      %1619 = vmatprep.subr.bf16.mxu0 %v1556
      %1620 = vmatpush1.bf16.msra.mxu0 %v1555
      %1621 = vmatprep.subr.bf16.mxu0 %v1558
      %1622 = vmatpush1.bf16.msra.mxu0 %v1557
      %1623 = vmatprep.subr.bf16.mxu0 %v1560
      %1624 = vmatpush1.bf16.msra.mxu0 %v1559
      %1625 = vmatprep.subr.bf16.mxu0 %v1562
      %1626 = vmatpush1.bf16.msra.mxu0 %v1561
      %1627 = vmatprep.subr.bf16.mxu0 %v1564
      %1628 = vmatpush1.bf16.msra.mxu0 %v1563
      %1629 = vmatprep.subr.bf16.mxu0 %v1566
      %1630 = vmatpush1.bf16.msra.mxu0 %v1565
      %1631 = vmatprep.subr.bf16.mxu0 %v1568
      %1632 = vmatpush1.bf16.msra.mxu0 %v1567
      %1633 = vmatprep.mubr.bf16.mxu0 %v1438
      %1634 = vmatmul.mubr.bf16.gmra.mrb[0].mxu0 %v1421
      %v1635 = vpop.f32.mrb[0].mxu0
      %v1636 = vadd.f32 %v1384, %v1635
      %v1637 = vpop.f32.mrb[0].mxu0
      %v1638 = vadd.f32 %v1386, %v1637
      %v1639 = vpop.f32.mrb[0].mxu0
      %v1640 = vadd.f32 %v1388, %v1639
      %v1641 = vpop.f32.mrb[0].mxu0
      %v1642 = vadd.f32 %v1390, %v1641
      %1643 = vdwg.mxu0
      %v1644 = vld [vmem:[#allocation2 + $0x10] sm:$0xff]
      %v1645 = vld [vmem:[#allocation2 + $0x18] sm:$0xff]
      %v1646 = vld [vmem:[#allocation2 + $0x20] sm:$0x11]
      %s1647 = scalar_lea.vmem %s4, 512
      %v1648 = vld [vmem:[%s1647] sm:$0xff]
      %v1649 = vld [vmem:[%s1647 + $0x8] sm:$0xff]
      %v1650 = vld [vmem:[%s1647 + $0x10] sm:$0xff]
      %v1651 = vld [vmem:[%s1647 + $0x18] sm:$0xff]
      %v1652 = vld [vmem:[%s1647 + $0x20] sm:$0xff]
      %v1653 = vld [vmem:[%s1647 + $0x28] sm:$0xff]
      %v1654 = vld [vmem:[%s1647 + $0x30] sm:$0xff]
      %v1655 = vld [vmem:[%s1647 + $0x38] sm:$0xff]
      %v1656 = vld [vmem:[%s1647 + $0x40] sm:$0xff]
      %v1657 = vld [vmem:[%s1647 + $0x48] sm:$0xff]
      %v1658 = vld [vmem:[%s1647 + $0x50] sm:$0xff]
      %v1659 = vld [vmem:[%s1647 + $0x58] sm:$0xff]
      %v1660 = vld [vmem:[%s1647 + $0x60] sm:$0xff]
      %v1661 = vld [vmem:[%s1647 + $0x68] sm:$0xff]
      %v1662 = vld [vmem:[%s1647 + $0x70] sm:$0xff]
      %v1663 = vld [vmem:[%s1647 + $0x78] sm:$0xff]
      %v1664 = vld [vmem:[%s1647 + $0x80] sm:$0xff]
      %v1665 = vld [vmem:[%s1647 + $0x88] sm:$0xff]
      %v1666 = vld [vmem:[%s1647 + $0x90] sm:$0xff]
      %v1667 = vld [vmem:[%s1647 + $0x98] sm:$0xff]
      %v1668 = vld [vmem:[%s1647 + $0xa0] sm:$0xff]
      %v1669 = vld [vmem:[%s1647 + $0xa8] sm:$0xff]
      %v1670 = vld [vmem:[%s1647 + $0xb0] sm:$0xff]
      %v1671 = vld [vmem:[%s1647 + $0xb8] sm:$0xff]
      %v1672 = vld [vmem:[%s1647 + $0xc0] sm:$0xff]
      %v1673 = vld [vmem:[%s1647 + $0xc8] sm:$0xff]
      %v1674 = vld [vmem:[%s1647 + $0xd0] sm:$0xff]
      %v1675 = vld [vmem:[%s1647 + $0xd8] sm:$0xff]
      %v1676 = vld [vmem:[%s1647 + $0xe0] sm:$0xff]
      %v1677 = vld [vmem:[%s1647 + $0xe8] sm:$0xff]
      %v1678 = vld [vmem:[%s1647 + $0xf0] sm:$0xff]
      %v1679 = vld [vmem:[%s1647 + $0xf8] sm:$0xff]
      %v1683 = vunpack.c.l.b16 %v1644
      %v1684 = vunpack.c.h.b16 %v1644
      %v1685 = vunpack.c.l.b16 %v1645
      %v1686 = vunpack.c.h.b16 %v1645
      %v1687 = vunpack.c.l.b16 %v1646
      %v1688 = vunpack.c.h.b16 %v1646
      %v1689 = vpack.c.b16 %v1685, %v1683
      %v1690 = vpack.c.b16 %v1686, %v1684
      %v1691 = vpack.c.b16 %v1687, %v1687
      %v1692 = vpack.c.b16 %v1688, %v1688
      %v1694 = vshrl.u32 %v1689, 16
      %v1696 = vshll.u32 %v1689, 16
      %v1698 = vrot.slane %v1696, 1
      %v1699 = vor.u32 %v1694, %v1698
      %v1701 = vshll.u32 %v1691, 16
      %v1703 = vrot.slane %v1701, 1
      %v1704 = vsel %vm361, %v1699, %v1703
      %v1706 = vshrl.u32 %v1690, 16
      %v1708 = vshll.u32 %v1690, 16
      %v1710 = vrot.slane %v1708, 1
      %v1711 = vor.u32 %v1706, %v1710
      %v1713 = vshll.u32 %v1692, 16
      %v1715 = vrot.slane %v1713, 1
      %v1716 = vsel %vm361, %v1711, %v1715
      %v1751 = vunpack.c.l.b16 %v1648
      %v1752 = vunpack.c.h.b16 %v1648
      %v1753 = vunpack.c.l.b16 %v1649
      %v1754 = vunpack.c.h.b16 %v1649
      %v1755 = vunpack.c.l.b16 %v1650
      %v1756 = vunpack.c.h.b16 %v1650
      %v1757 = vunpack.c.l.b16 %v1651
      %v1758 = vunpack.c.h.b16 %v1651
      %v1759 = vunpack.c.l.b16 %v1652
      %v1760 = vunpack.c.h.b16 %v1652
      %v1761 = vunpack.c.l.b16 %v1653
      %v1762 = vunpack.c.h.b16 %v1653
      %v1763 = vunpack.c.l.b16 %v1654
      %v1764 = vunpack.c.h.b16 %v1654
      %v1765 = vunpack.c.l.b16 %v1655
      %v1766 = vunpack.c.h.b16 %v1655
      %v1767 = vunpack.c.l.b16 %v1656
      %v1768 = vunpack.c.h.b16 %v1656
      %v1769 = vunpack.c.l.b16 %v1657
      %v1770 = vunpack.c.h.b16 %v1657
      %v1771 = vunpack.c.l.b16 %v1658
      %v1772 = vunpack.c.h.b16 %v1658
      %v1773 = vunpack.c.l.b16 %v1659
      %v1774 = vunpack.c.h.b16 %v1659
      %v1775 = vunpack.c.l.b16 %v1660
      %v1776 = vunpack.c.h.b16 %v1660
      %v1777 = vunpack.c.l.b16 %v1661
      %v1778 = vunpack.c.h.b16 %v1661
      %v1779 = vunpack.c.l.b16 %v1662
      %v1780 = vunpack.c.h.b16 %v1662
      %v1781 = vunpack.c.l.b16 %v1663
      %v1782 = vunpack.c.h.b16 %v1663
      %v1783 = vunpack.c.l.b16 %v1664
      %v1784 = vunpack.c.h.b16 %v1664
      %v1785 = vunpack.c.l.b16 %v1665
      %v1786 = vunpack.c.h.b16 %v1665
      %v1787 = vunpack.c.l.b16 %v1666
      %v1788 = vunpack.c.h.b16 %v1666
      %v1789 = vunpack.c.l.b16 %v1667
      %v1790 = vunpack.c.h.b16 %v1667
      %v1791 = vunpack.c.l.b16 %v1668
      %v1792 = vunpack.c.h.b16 %v1668
      %v1793 = vunpack.c.l.b16 %v1669
      %v1794 = vunpack.c.h.b16 %v1669
      %v1795 = vunpack.c.l.b16 %v1670
      %v1796 = vunpack.c.h.b16 %v1670
      %v1797 = vunpack.c.l.b16 %v1671
      %v1798 = vunpack.c.h.b16 %v1671
      %v1799 = vunpack.c.l.b16 %v1672
      %v1800 = vunpack.c.h.b16 %v1672
      %v1801 = vunpack.c.l.b16 %v1673
      %v1802 = vunpack.c.h.b16 %v1673
      %v1803 = vunpack.c.l.b16 %v1674
      %v1804 = vunpack.c.h.b16 %v1674
      %v1805 = vunpack.c.l.b16 %v1675
      %v1806 = vunpack.c.h.b16 %v1675
      %v1807 = vunpack.c.l.b16 %v1676
      %v1808 = vunpack.c.h.b16 %v1676
      %v1809 = vunpack.c.l.b16 %v1677
      %v1810 = vunpack.c.h.b16 %v1677
      %v1811 = vunpack.c.l.b16 %v1678
      %v1812 = vunpack.c.h.b16 %v1678
      %v1813 = vunpack.c.l.b16 %v1679
      %v1814 = vunpack.c.h.b16 %v1679
      %v1815 = vpack.c.b16 %v1753, %v1751
      %v1816 = vpack.c.b16 %v1754, %v1752
      %v1817 = vpack.c.b16 %v1757, %v1755
      %v1818 = vpack.c.b16 %v1758, %v1756
      %v1819 = vpack.c.b16 %v1761, %v1759
      %v1820 = vpack.c.b16 %v1762, %v1760
      %v1821 = vpack.c.b16 %v1765, %v1763
      %v1822 = vpack.c.b16 %v1766, %v1764
      %v1823 = vpack.c.b16 %v1769, %v1767
      %v1824 = vpack.c.b16 %v1770, %v1768
      %v1825 = vpack.c.b16 %v1773, %v1771
      %v1826 = vpack.c.b16 %v1774, %v1772
      %v1827 = vpack.c.b16 %v1777, %v1775
      %v1828 = vpack.c.b16 %v1778, %v1776
      %v1829 = vpack.c.b16 %v1781, %v1779
      %v1830 = vpack.c.b16 %v1782, %v1780
      %v1831 = vpack.c.b16 %v1785, %v1783
      %v1832 = vpack.c.b16 %v1786, %v1784
      %v1833 = vpack.c.b16 %v1789, %v1787
      %v1834 = vpack.c.b16 %v1790, %v1788
      %v1835 = vpack.c.b16 %v1793, %v1791
      %v1836 = vpack.c.b16 %v1794, %v1792
      %v1837 = vpack.c.b16 %v1797, %v1795
      %v1838 = vpack.c.b16 %v1798, %v1796
      %v1839 = vpack.c.b16 %v1801, %v1799
      %v1840 = vpack.c.b16 %v1802, %v1800
      %v1841 = vpack.c.b16 %v1805, %v1803
      %v1842 = vpack.c.b16 %v1806, %v1804
      %v1843 = vpack.c.b16 %v1809, %v1807
      %v1844 = vpack.c.b16 %v1810, %v1808
      %v1845 = vpack.c.b16 %v1813, %v1811
      %v1846 = vpack.c.b16 %v1814, %v1812
      %1879 = vmatprep.subr.bf16.mxu0 %v1816
      %1880 = vmatpush1.bf16.msra.mxu0 %v1815
      %1881 = vmatprep.subr.bf16.mxu0 %v1818
      %1882 = vmatpush1.bf16.msra.mxu0 %v1817
      %1883 = vmatprep.subr.bf16.mxu0 %v1820
      %1884 = vmatpush1.bf16.msra.mxu0 %v1819
      %1885 = vmatprep.subr.bf16.mxu0 %v1822
      %1886 = vmatpush1.bf16.msra.mxu0 %v1821
      %1887 = vmatprep.subr.bf16.mxu0 %v1824
      %1888 = vmatpush1.bf16.msra.mxu0 %v1823
      %1889 = vmatprep.subr.bf16.mxu0 %v1826
      %1890 = vmatpush1.bf16.msra.mxu0 %v1825
      %1891 = vmatprep.subr.bf16.mxu0 %v1828
      %1892 = vmatpush1.bf16.msra.mxu0 %v1827
      %1893 = vmatprep.subr.bf16.mxu0 %v1830
      %1894 = vmatpush1.bf16.msra.mxu0 %v1829
      %1895 = vmatprep.subr.bf16.mxu0 %v1832
      %1896 = vmatpush1.bf16.msra.mxu0 %v1831
      %1897 = vmatprep.subr.bf16.mxu0 %v1834
      %1898 = vmatpush1.bf16.msra.mxu0 %v1833
      %1899 = vmatprep.subr.bf16.mxu0 %v1836
      %1900 = vmatpush1.bf16.msra.mxu0 %v1835
      %1901 = vmatprep.subr.bf16.mxu0 %v1838
      %1902 = vmatpush1.bf16.msra.mxu0 %v1837
      %1903 = vmatprep.subr.bf16.mxu0 %v1840
      %1904 = vmatpush1.bf16.msra.mxu0 %v1839
      %1905 = vmatprep.subr.bf16.mxu0 %v1842
      %1906 = vmatpush1.bf16.msra.mxu0 %v1841
      %1907 = vmatprep.subr.bf16.mxu0 %v1844
      %1908 = vmatpush1.bf16.msra.mxu0 %v1843
      %1909 = vmatprep.subr.bf16.mxu0 %v1846
      %1910 = vmatpush1.bf16.msra.mxu0 %v1845
      %1911 = vmatprep.mubr.bf16.mxu0 %v1716
      %1912 = vmatmul.mubr.bf16.gmra.mrb[0].mxu0 %v1704
      %v1913 = vpop.f32.mrb[0].mxu0
      %v1914 = vadd.f32 0.0, %v1913
      %v1915 = vpop.f32.mrb[0].mxu0
      %v1916 = vadd.f32 0.0, %v1915
      %v1917 = vpop.f32.mrb[0].mxu0
      %v1918 = vadd.f32 0.0, %v1917
      %v1919 = vpop.f32.mrb[0].mxu0
      %v1920 = vadd.f32 0.0, %v1919
      %1921 = vdwg.mxu0
      %v1922 = vadd.f32 %v1636, %v1914
      %v1923 = vadd.f32 %v1638, %v1916
      %v1924 = vadd.f32 %v1640, %v1918
      %v1925 = vadd.f32 %v1642, %v1920
      %v1926 = vld [vmem:[%s5] sm:$0x3]
      %v1928 = vlaneseq
      %v1929 = vshrl.u32 %v1928, 7
      %v1930 = vsub.s32 0, %v1929
      %v1931 = vrot.slane %v1926, %v1930
      %v1932 = vlaneseq
      %v1933 = vshrl.u32 %v1932, 7
      %v1934 = vsub.s32 1, %v1933
      %v1935 = vrot.slane %v1926, %v1934
      %v1938 = vmul.f32 %v1922, %v1931
      %v1939 = vmul.f32 %v1923, %v1935
      %v1940 = vmul.f32 %v1924, %v1931
      %v1941 = vmul.f32 %v1925, %v1935
      %v1942 = vld [vmem:[%s6] sm:$0x3]
      %v1944 = vlaneseq
      %v1945 = vshrl.u32 %v1944, 7
      %v1946 = vsub.s32 0, %v1945
      %v1947 = vrot.slane %v1942, %v1946
      %v1948 = vlaneseq
      %v1949 = vshrl.u32 %v1948, 7
      %v1950 = vsub.s32 1, %v1949
      %v1951 = vrot.slane %v1942, %v1950
      %v1954 = vadd.f32 %v1938, %v1947
      %v1955 = vadd.f32 %v1939, %v1951
      %v1956 = vadd.f32 %v1940, %v1947
      %v1957 = vadd.f32 %v1941, %v1951
      %v1958 = vunpack.c.l.bf16 %v280
      %v1959 = vunpack.c.h.bf16 %v280
      %v1960 = vunpack.c.l.bf16 %v281
      %v1961 = vunpack.c.h.bf16 %v281
      %v1962 = vunpack.c.l.bf16 %v282
      %v1963 = vunpack.c.h.bf16 %v282
      %vm1970 = vcmask 1046528
      %v1971 = vrot.slane %v1958, 1
      %v1972 = vrot.slane %v1960, 1
      %v1973 = vsel %vm1970, %v1971, %v1972
      %v1974 = vrot.slane %v1959, 1
      %v1975 = vrot.slane %v1961, 1
      %v1976 = vsel %vm1970, %v1974, %v1975
      %v1977 = vrot.slane %v1962, 1
      %v1978 = vsel %vm1970, %v1972, %v1977
      %v1979 = vrot.slane %v1963, 1
      %v1980 = vsel %vm1970, %v1975, %v1979
      %v1985 = vadd.f32 %v1954, %v1973
      %v1986 = vadd.f32 %v1955, %v1976
      %v1987 = vadd.f32 %v1956, %v1978
      %v1988 = vadd.f32 %v1957, %v1980
      %v1989 = vmax.f32 %v1985, 0.0
      %v1990 = vmax.f32 %v1986, 0.0
      %v1991 = vmax.f32 %v1987, 0.0
      %v1992 = vmax.f32 %v1988, 0.0
      %v1993 = vpack.c.bf16 %v1991, %v1989
      %v1994 = vpack.c.bf16 %v1992, %v1990
      %v1997 = vunpack.c.l.b16 %v1993
      %v1998 = vunpack.c.l.b16 %v1994
      %v1999 = vunpack.c.h.b16 %v1993
      %v2000 = vunpack.c.h.b16 %v1994
      %v2001 = vpack.c.b16 %v1998, %v1997
      %v2002 = vpack.c.b16 %v2000, %v1999
      %2005 = vst [vmem:[%s278] sm:$0xff] %v2001
      %2006 = vst [vmem:[%s278 + $0x8] sm:$0xff] %v2002
      %p2007 = scmp.lt.s32.totalorder %s18, 1
      %s2008 = scalar_select %p2007, %s18, 1
      %s2009 = smul.addr %s2008, 4
      %s2010 = smul.addr %s2009, 4
      %s2011 = scalar_lea.vmem %s7, %s2010
      // Predicated region
      $region49: #{residual_block.1} parent=47 // pred_check
        %p2012 = pneg %p188
      $region50: #{residual_block.1} parent=47 // pred_check_branch
        %2014 = sbr.rel (%p2012) target = $region52
      $region51: #{residual_block.1} parent=47 // pred_region
        _
      $region52: #{residual_block.1} parent=47 // pred_fallthru
        _
    $region48: #{residual_block.1} parent=5 // pred_fallthru
      _
    %p2015 = scmp.le.s32.totalorder 2, %s13
    // Predicated region
    $region53: #{residual_block.1} parent=5 // pred_check
      %p2016 = pneg %p2015
    $region54: #{residual_block.1} parent=5 // pred_check_branch
      %2018 = sbr.rel (%p2016) target = $region56
    $region55: #{residual_block.1} parent=5 // pred_region
      %s2019 = ssub.s32 %s13, 2
      // Predicated region
      $region57: #{residual_block.1} parent=55 // pred_check
        %p2020 = pneg %p194
      $region58: #{residual_block.1} parent=55 // pred_check_branch
        %2022 = sbr.rel (%p2020) target = $region60
      $region59: #{residual_block.1} parent=55 // pred_region
        %p2023 = scmp.lt.s32.totalorder %s19, 1
        %s2024 = scalar_select %p2023, %s19, 1
        %s2025 = smul.addr %s2024, 4
        %s2026 = smul.addr %s2025, 4
        %s2027 = scalar_lea.vmem %s7, %s2026
      $region60: #{residual_block.1} parent=55 // pred_fallthru
        _
    $region56: #{residual_block.1} parent=5 // pred_fallthru
      _
  $region6: #{residual_block.1} parent=0 // loop_footer
    %s17 = sadd.s32 1, %s13
  $region7: #{residual_block.1} parent=0 // loop_footer_branch
    %12 = sbr.rel target = $region3
  $region8: #{residual_block.1} parent=0 // loop_exit
    _

</llo_original>
